<compile_context>
chip_gen: v7x
topology: tpu7x:2x2x1
jax: 0.10.0
libtpu: 0.0.40
codegen_flags: <defaults>
</compile_context>

<pallas_src>
import jax
import jax.numpy as jnp
from jax.experimental import pallas as pl
from jax.experimental.pallas import tpu as pltpu

_VMEM_LIMIT = 48 * 1024 * 1024  # > v5e/v6e/v7x default scoped limits, < v7x physical


def _pick_row_tile(n_rows, bytes_per_row, target_bytes):
    return int(max(1, min(n_rows, target_bytes // max(bytes_per_row, 1))))


# ---------------------------------------------------------------------------
# use_conv=True path: Conv2d(C, C, kernel_size=3, stride=2, padding=1)
# ---------------------------------------------------------------------------
def _conv_down_kernel(x_ref, xh_ref, w_ref, b_ref, o_ref, acc_ref):
    # x_ref : (1, 2, 2, TH, B, C)  phase-factored, zero-padded input rows of this tile
    # xh_ref: (1, 1, 2, 1,  B, C)  halo: phase rh=0 row (t+1)*TH, both rw phases
    # w_ref : (9, C, C)            3x3 taps, (Cin, Cout) per tap
    # b_ref : (1, C)               f32 bias
    # o_ref : (1, TH, Wo, C)
    # acc_ref: VMEM (TH*Wo, C) f32 accumulator scratch
    _, TH, Wo, C = o_ref.shape
    M = TH * Wo

    # 4 phase-slab loads (instead of 9 per-tap loads).
    s00 = x_ref[0, 0, 0]          # rows 2a   , cols 2b      (TH, B, C)
    s01 = x_ref[0, 0, 1]          # rows 2a   , cols 2b+1
    s10 = x_ref[0, 1, 0]          # rows 2a+1 , cols 2b
    s11 = x_ref[0, 1, 1]          # rows 2a+1 , cols 2b+1
    h0 = xh_ref[0, 0, 0, 0]       # halo row (phase rh=0, rw=0)  (B, C)
    h1 = xh_ref[0, 0, 1, 0]       # halo row (phase rh=0, rw=1)  (B, C)

    # kh=2 row source: phase-0 rows shifted by one, last row comes from halo.
    if TH > 1:
        s20 = jnp.concatenate([s00[1:], h0[None]], axis=0)
        s21 = jnp.concatenate([s01[1:], h1[None]], axis=0)
    else:
        s20 = h0[None]
        s21 = h1[None]

    rows = ((s00, s01), (s10, s11), (s20, s21))

    first = True
    for kh in range(3):
        r_even, r_odd = rows[kh]
        # kw=0 -> even cols, offset 0 ; kw=1 -> odd cols, offset 0 ; kw=2 -> even cols, offset 1
        taps = (r_even[:, 0:Wo, :], r_odd[:, 0:Wo, :], r_even[:, 1:1 + Wo, :])
        for kw in range(3):
            t2d = taps[kw].reshape(M, C)                 # flat (TH*Wo, C): fills the MXU
            contrib = jnp.dot(t2d, w_ref[kh * 3 + kw],
                              preferred_element_type=jnp.float32)
            if first:
                acc_ref[...] = contrib
                first = False
            else:
                acc_ref[...] += contrib

    out = acc_ref[...] + b_ref[...]                      # (M, C) + (1, C), f32
    o_ref[0] = out.reshape(TH, Wo, C).astype(o_ref.dtype)


def downsample_conv(x_nchw, w_hwio, bias, *, compute_dtype=None,
                    row_tile=None, row_tile_bytes=2 * 1024 * 1024):
    N, C, H, W = x_nchw.shape
    Ho = (H - 1) // 2 + 1
    Wo = (W - 1) // 2 + 1
    B = Wo + 1
    out_dtype = x_nchw.dtype
    in_dtype = compute_dtype if compute_dtype is not None else x_nchw.dtype
    in_item = jnp.dtype(in_dtype).itemsize

    # Row-tile so one step's blocks stay small (v7x 64 MiB VMEM friendly).
    per_row = 4 * B * C * in_item + Wo * C * (jnp.dtype(out_dtype).itemsize + 4)
    if row_tile is not None:
        TH = max(1, min(int(row_tile), Ho))
    else:
        TH = _pick_row_tile(Ho, per_row, row_tile_bytes)
    nt = (Ho + TH - 1) // TH
    Ho_pad = nt * TH
    A_pad = Ho_pad + 1                # +1 phase-0 row so every tile's halo is in bounds
    Hp, Wp = 2 * A_pad, 2 * B

    # Zero-pad in NCHW (1 top/left = conv padding, rest bottom/right), then a
    # single fused reshape+transpose to the phase-factored NHWC layout:
    #   xr[n, rh, rw, a, b, c] = x_padded[n, c, 2a+rh, 2b+rw]
    xp = jnp.pad(x_nchw, ((0, 0), (0, 0), (1, Hp - H - 1), (1, Wp - W - 1)))
    if compute_dtype is not None:
        xp = xp.astype(compute_dtype)
    xr = xp.reshape(N, C, A_pad, 2, B, 2).transpose(0, 3, 5, 2, 4, 1)

    w9 = w_hwio.reshape(9, C, C)
    if compute_dtype is not None:
        w9 = w9.astype(compute_dtype)
    b2 = bias.reshape(1, C).astype(jnp.float32)

    out = pl.pallas_call(
        _conv_down_kernel,
        out_shape=jax.ShapeDtypeStruct((N, Ho_pad, Wo, C), out_dtype),
        grid_spec=pltpu.PrefetchScalarGridSpec(
            num_scalar_prefetch=0,
            grid=(N, nt),
            in_specs=[
                # main phase block for this row tile
                pl.BlockSpec((1, 2, 2, TH, B, C), lambda n, t: (n, 0, 0, t, 0, 0)),
                # halo: phase rh=0, single row (t+1)*TH, both rw phases
                pl.BlockSpec((1, 1, 2, 1, B, C),
                             lambda n, t: (n, 0, 0, (t + 1) * TH, 0, 0)),
                pl.BlockSpec((9, C, C), lambda n, t: (0, 0, 0)),
                pl.BlockSpec((1, C), lambda n, t: (0, 0)),
            ],
            out_specs=pl.BlockSpec((1, TH, Wo, C), lambda n, t: (n, t, 0, 0)),
            scratch_shapes=[pltpu.VMEM((TH * Wo, C), jnp.float32)],
        ),
        compiler_params=pltpu.CompilerParams(
            dimension_semantics=("parallel", "parallel"),
            vmem_limit_bytes=_VMEM_LIMIT,
        ),
    )(xr, xr, w9, b2)

    if Ho_pad != Ho:
        out = out[:, :Ho]
    return jnp.transpose(out, (0, 3, 1, 2))               # back to NCHW


# ---------------------------------------------------------------------------
# use_conv=False path: AvgPool2d(kernel_size=2, stride=2)
# ---------------------------------------------------------------------------
def _avgpool_kernel(x_ref, o_ref):
    # x_ref: (1, 2, 2, TH, Wo, C), o_ref: (1, TH, Wo, C); sum in f32.
    s = (x_ref[0, 0, 0].astype(jnp.float32) + x_ref[0, 0, 1].astype(jnp.float32)
         + x_ref[0, 1, 0].astype(jnp.float32) + x_ref[0, 1, 1].astype(jnp.float32))
    o_ref[0] = (s * 0.25).astype(o_ref.dtype)


def downsample_pool(x_nchw, *, row_tile=None, row_tile_bytes=4 * 1024 * 1024):
    N, C, H, W = x_nchw.shape
    Ho, Wo = H // 2, W // 2
    item = jnp.dtype(x_nchw.dtype).itemsize

    per_row = (4 + 1) * Wo * C * item
    if row_tile is not None:
        TH = max(1, min(int(row_tile), Ho))
    else:
        TH = _pick_row_tile(Ho, per_row, row_tile_bytes)
    nt = (Ho + TH - 1) // TH
    Ho_pad = nt * TH

    xc = x_nchw[:, :, :2 * Ho, :2 * Wo]
    if Ho_pad != Ho:
        xc = jnp.pad(xc, ((0, 0), (0, 0), (0, 2 * (Ho_pad - Ho)), (0, 0)))
    # single fused reshape+transpose: xr[n,rh,rw,i,j,c] = xc[n,c,2i+rh,2j+rw]
    xr = xc.reshape(N, C, Ho_pad, 2, Wo, 2).transpose(0, 3, 5, 2, 4, 1)

    out = pl.pallas_call(
        _avgpool_kernel,
        out_shape=jax.ShapeDtypeStruct((N, Ho_pad, Wo, C), x_nchw.dtype),
        grid_spec=pltpu.PrefetchScalarGridSpec(
            num_scalar_prefetch=0,
            grid=(N, nt),
            in_specs=[pl.BlockSpec((1, 2, 2, TH, Wo, C),
                                   lambda n, t: (n, 0, 0, t, 0, 0))],
            out_specs=pl.BlockSpec((1, TH, Wo, C), lambda n, t: (n, t, 0, 0)),
        ),
        compiler_params=pltpu.CompilerParams(
            dimension_semantics=("parallel", "parallel"),
            vmem_limit_bytes=_VMEM_LIMIT,
        ),
    )(xr)

    if Ho_pad != Ho:
        out = out[:, :Ho]
    return jnp.transpose(out, (0, 3, 1, 2))               # back to NCHW


# ---------------------------------------------------------------------------
# Module wrapper
# ---------------------------------------------------------------------------
class Downsample:
    def __init__(self, channels, use_conv, key=None, compute_dtype=None):
        self.channels = channels
        self.use_conv = use_conv
        self.compute_dtype = compute_dtype
        if use_conv:
            key = key if key is not None else jax.random.PRNGKey(0)
            kw, kb = jax.random.split(key)
            fan_in = channels * 3 * 3
            bound = 1.0 / (fan_in ** 0.5)
            # weight stored as HWIO: (3, 3, Cin, Cout)
            self.weight = jax.random.uniform(
                kw, (3, 3, channels, channels), jnp.float32, -bound, bound)
            self.bias = jax.random.uniform(kb, (channels,), jnp.float32, -bound, bound)

    def __call__(self, x_nchw):
        if self.use_conv:
            return downsample_conv(x_nchw, self.weight, self.bias,
                                   compute_dtype=self.compute_dtype)
        return downsample_pool(x_nchw)


# ---------------------------------------------------------------------------
# Reference implementations (pure JAX) for verification
# ---------------------------------------------------------------------------
def _conv_ref(x_nchw, w_hwio, bias):
    x = jnp.transpose(x_nchw, (0, 2, 3, 1))
    y = jax.lax.conv_general_dilated(
        x, w_hwio, window_strides=(2, 2), padding=((1, 1), (1, 1)),
        dimension_numbers=("NHWC", "HWIO", "NHWC"),
    ) + bias
    return jnp.transpose(y, (0, 3, 1, 2))


def _pool_ref(x_nchw):
    N, C, H, W = x_nchw.shape
    Ho, Wo = H // 2, W // 2
    xr = x_nchw[:, :, : 2 * Ho, : 2 * Wo].reshape(N, C, Ho, 2, Wo, 2)
    return xr.mean(axis=(3, 5))


if __name__ == "__main__":
    key = jax.random.PRNGKey(0)
    kx, kx2, kp = jax.random.split(key, 3)
    x = jax.random.normal(kx, (2, 4, 16, 16), jnp.float32)        # NCHW

    # use_conv=True
    ds_conv = Downsample(channels=4, use_conv=True, key=kp)
    out_conv = jax.block_until_ready(ds_conv(x))
    ref_conv = _conv_ref(x, ds_conv.weight, ds_conv.bias)
    assert out_conv.shape == (2, 4, 8, 8)
    assert jnp.allclose(out_conv, ref_conv, atol=1e-4, rtol=1e-4)

    # use_conv=False
    ds_pool = Downsample(channels=4, use_conv=False)
    out_pool = jax.block_until_ready(ds_pool(x))
    ref_pool = _pool_ref(x)
    assert out_pool.shape == (2, 4, 8, 8)
    assert jnp.allclose(out_pool, ref_pool, atol=1e-5, rtol=1e-5)

    # Odd spatial size + forced multi-tile grid (exercises halo / padding path)
    x2 = jax.random.normal(kx2, (1, 8, 15, 15), jnp.float32)
    ds_conv2 = Downsample(channels=8, use_conv=True, key=kp)
    out_c2 = jax.block_until_ready(
        downsample_conv(x2, ds_conv2.weight, ds_conv2.bias, row_tile=3))
    ref_c2 = _conv_ref(x2, ds_conv2.weight, ds_conv2.bias)
    assert out_c2.shape == (1, 8, 8, 8)
    assert jnp.allclose(out_c2, ref_c2, atol=1e-4, rtol=1e-4)

    out_p2 = jax.block_until_ready(downsample_pool(x2, row_tile=3))
    ref_p2 = _pool_ref(x2)
    assert out_p2.shape == (1, 8, 7, 7)
    assert jnp.allclose(out_p2, ref_p2, atol=1e-5, rtol=1e-5)

    print("KERNEL_OK")
</pallas_src>

<mosaic_0001>
module attributes {stable_mosaic.version = 11 : i64} {
  func.func @_conv_down_kernel(%arg0: i32, %arg1: i32, %arg2: memref<1x2x2x8x9x4xf32, #tpu.memory_space<vmem>>, %arg3: memref<1x1x2x1x9x4xf32, #tpu.memory_space<vmem>>, %arg4: memref<9x4x4xf32, #tpu.memory_space<vmem>>, %arg5: memref<1x4xf32, #tpu.memory_space<vmem>>, %arg6: memref<1x8x8x4xf32, #tpu.memory_space<vmem>>, %arg7: memref<64x4xf32, #tpu.memory_space<vmem>>) attributes {dimension_semantics = [#tpu.dimension_semantics<parallel>, #tpu.dimension_semantics<parallel>], iteration_bounds = array<i64: 2, 1>, scalar_prefetch = 0 : i64, scratch_operands = 1 : i64, tpu.core_type = #tpu.core_type<tc>, window_params = [{transform_indices = @transform_0, window_bounds = array<i64: 1, 2, 2, 8, 9, 4>}, {transform_indices = @transform_1, window_bounds = array<i64: 1, 1, 2, 1, 9, 4>}, {pipeline_mode = #tpu.pipeline_mode<synchronous>, transform_indices = @transform_2, window_bounds = array<i64: 9, 4, 4>}, {pipeline_mode = #tpu.pipeline_mode<synchronous>, transform_indices = @transform_3, window_bounds = array<i64: 1, 4>}, {transform_indices = @transform_4, window_bounds = array<i64: 1, 8, 8, 4>}]} {
    %c0 = arith.constant 0 : index
    %c0_0 = arith.constant 0 : index
    %c0_1 = arith.constant 0 : index
    %c0_2 = arith.constant 0 : index
    %c0_3 = arith.constant 0 : index
    %c0_4 = arith.constant 0 : index
    %0 = vector.load %arg2[%c0, %c0_0, %c0_1, %c0_2, %c0_3, %c0_4] : memref<1x2x2x8x9x4xf32, #tpu.memory_space<vmem>>, vector<1x1x1x8x9x4xf32>
    %1 = vector.shape_cast %0 : vector<1x1x1x8x9x4xf32> to vector<8x9x4xf32>
    %c0_5 = arith.constant 0 : index
    %c0_6 = arith.constant 0 : index
    %c1 = arith.constant 1 : index
    %c0_7 = arith.constant 0 : index
    %c0_8 = arith.constant 0 : index
    %c0_9 = arith.constant 0 : index
    %2 = vector.load %arg2[%c0_5, %c0_6, %c1, %c0_7, %c0_8, %c0_9] : memref<1x2x2x8x9x4xf32, #tpu.memory_space<vmem>>, vector<1x1x1x8x9x4xf32>
    %3 = vector.shape_cast %2 : vector<1x1x1x8x9x4xf32> to vector<8x9x4xf32>
    %c0_10 = arith.constant 0 : index
    %c1_11 = arith.constant 1 : index
    %c0_12 = arith.constant 0 : index
    %c0_13 = arith.constant 0 : index
    %c0_14 = arith.constant 0 : index
    %c0_15 = arith.constant 0 : index
    %4 = vector.load %arg2[%c0_10, %c1_11, %c0_12, %c0_13, %c0_14, %c0_15] : memref<1x2x2x8x9x4xf32, #tpu.memory_space<vmem>>, vector<1x1x1x8x9x4xf32>
    %5 = vector.shape_cast %4 : vector<1x1x1x8x9x4xf32> to vector<8x9x4xf32>
    %c0_16 = arith.constant 0 : index
    %c1_17 = arith.constant 1 : index
    %c1_18 = arith.constant 1 : index
    %c0_19 = arith.constant 0 : index
    %c0_20 = arith.constant 0 : index
    %c0_21 = arith.constant 0 : index
    %6 = vector.load %arg2[%c0_16, %c1_17, %c1_18, %c0_19, %c0_20, %c0_21] : memref<1x2x2x8x9x4xf32, #tpu.memory_space<vmem>>, vector<1x1x1x8x9x4xf32>
    %7 = vector.shape_cast %6 : vector<1x1x1x8x9x4xf32> to vector<8x9x4xf32>
    %c0_22 = arith.constant 0 : index
    %c0_23 = arith.constant 0 : index
    %c0_24 = arith.constant 0 : index
    %c0_25 = arith.constant 0 : index
    %c0_26 = arith.constant 0 : index
    %c0_27 = arith.constant 0 : index
    %8 = vector.load %arg3[%c0_22, %c0_23, %c0_24, %c0_25, %c0_26, %c0_27] : memref<1x1x2x1x9x4xf32, #tpu.memory_space<vmem>>, vector<1x1x1x1x9x4xf32>
    %9 = vector.shape_cast %8 : vector<1x1x1x1x9x4xf32> to vector<9x4xf32>
    %c0_28 = arith.constant 0 : index
    %c0_29 = arith.constant 0 : index
    %c1_30 = arith.constant 1 : index
    %c0_31 = arith.constant 0 : index
    %c0_32 = arith.constant 0 : index
    %c0_33 = arith.constant 0 : index
    %10 = vector.load %arg3[%c0_28, %c0_29, %c1_30, %c0_31, %c0_32, %c0_33] : memref<1x1x2x1x9x4xf32, #tpu.memory_space<vmem>>, vector<1x1x1x1x9x4xf32>
    %11 = vector.shape_cast %10 : vector<1x1x1x1x9x4xf32> to vector<9x4xf32>
    %12 = vector.extract_strided_slice %1 {offsets = [1, 0, 0], sizes = [7, 9, 4], strides = [1, 1, 1]} : vector<8x9x4xf32> to vector<7x9x4xf32>
    %13 = vector.shape_cast %9 : vector<9x4xf32> to vector<1x9x4xf32>
    %14 = tpu.concatenate %12, %13 in 0 : vector<7x9x4xf32>, vector<1x9x4xf32> -> vector<8x9x4xf32>
    %15 = vector.extract_strided_slice %3 {offsets = [1, 0, 0], sizes = [7, 9, 4], strides = [1, 1, 1]} : vector<8x9x4xf32> to vector<7x9x4xf32>
    %16 = vector.shape_cast %11 : vector<9x4xf32> to vector<1x9x4xf32>
    %17 = tpu.concatenate %15, %16 in 0 : vector<7x9x4xf32>, vector<1x9x4xf32> -> vector<8x9x4xf32>
    %18 = vector.extract_strided_slice %1 {offsets = [0, 0, 0], sizes = [8, 8, 4], strides = [1, 1, 1]} : vector<8x9x4xf32> to vector<8x8x4xf32>
    %19 = vector.extract_strided_slice %3 {offsets = [0, 0, 0], sizes = [8, 8, 4], strides = [1, 1, 1]} : vector<8x9x4xf32> to vector<8x8x4xf32>
    %20 = vector.extract_strided_slice %1 {offsets = [0, 1, 0], sizes = [8, 8, 4], strides = [1, 1, 1]} : vector<8x9x4xf32> to vector<8x8x4xf32>
    %21 = vector.shape_cast %18 : vector<8x8x4xf32> to vector<64x4xf32>
    %c0_34 = arith.constant 0 : index
    %c0_35 = arith.constant 0 : index
    %c0_36 = arith.constant 0 : index
    %22 = vector.load %arg4[%c0_34, %c0_35, %c0_36] : memref<9x4x4xf32, #tpu.memory_space<vmem>>, vector<1x4x4xf32>
    %23 = vector.shape_cast %22 : vector<1x4x4xf32> to vector<4x4xf32>
    %cst = arith.constant dense<0.000000e+00> : vector<64x4xf32>
    %24 = tpu.matmul %21, %23, %cst {dimension_numbers = #tpu.dot_dimension_numbers<[1], [0], [0], [1], [0, 0, 1, 1], [], []>} : vector<64x4xf32>, vector<4x4xf32>, vector<64x4xf32> -> vector<64x4xf32>
    %c0_37 = arith.constant 0 : index
    %c0_38 = arith.constant 0 : index
    %25 = vector.load %arg7[%c0_37, %c0_38] : memref<64x4xf32, #tpu.memory_space<vmem>>, vector<64x4xf32>
    tpu.vector_store %arg7[%c0_37, %c0_38], %24 {strides = array<i32>} : memref<64x4xf32, #tpu.memory_space<vmem>>, vector<64x4xf32>,
    %26 = vector.shape_cast %19 : vector<8x8x4xf32> to vector<64x4xf32>
    %c1_39 = arith.constant 1 : index
    %c0_40 = arith.constant 0 : index
    %c0_41 = arith.constant 0 : index
    %27 = vector.load %arg4[%c1_39, %c0_40, %c0_41] : memref<9x4x4xf32, #tpu.memory_space<vmem>>, vector<1x4x4xf32>
    %28 = vector.shape_cast %27 : vector<1x4x4xf32> to vector<4x4xf32>
    %cst_42 = arith.constant dense<0.000000e+00> : vector<64x4xf32>
    %29 = tpu.matmul %26, %28, %cst_42 {dimension_numbers = #tpu.dot_dimension_numbers<[1], [0], [0], [1], [0, 0, 1, 1], [], []>} : vector<64x4xf32>, vector<4x4xf32>, vector<64x4xf32> -> vector<64x4xf32>
    %c0_43 = arith.constant 0 : index
    %c0_44 = arith.constant 0 : index
    %30 = vector.load %arg7[%c0_43, %c0_44] : memref<64x4xf32, #tpu.memory_space<vmem>>, vector<64x4xf32>
    %31 = arith.addf %30, %29 : vector<64x4xf32>
    %c0_45 = arith.constant 0 : index
    %c0_46 = arith.constant 0 : index
    %32 = vector.load %arg7[%c0_45, %c0_46] : memref<64x4xf32, #tpu.memory_space<vmem>>, vector<64x4xf32>
    tpu.vector_store %arg7[%c0_45, %c0_46], %31 {strides = array<i32>} : memref<64x4xf32, #tpu.memory_space<vmem>>, vector<64x4xf32>,
    %33 = vector.shape_cast %20 : vector<8x8x4xf32> to vector<64x4xf32>
    %c2 = arith.constant 2 : index
    %c0_47 = arith.constant 0 : index
    %c0_48 = arith.constant 0 : index
    %34 = vector.load %arg4[%c2, %c0_47, %c0_48] : memref<9x4x4xf32, #tpu.memory_space<vmem>>, vector<1x4x4xf32>
    %35 = vector.shape_cast %34 : vector<1x4x4xf32> to vector<4x4xf32>
    %cst_49 = arith.constant dense<0.000000e+00> : vector<64x4xf32>
    %36 = tpu.matmul %33, %35, %cst_49 {dimension_numbers = #tpu.dot_dimension_numbers<[1], [0], [0], [1], [0, 0, 1, 1], [], []>} : vector<64x4xf32>, vector<4x4xf32>, vector<64x4xf32> -> vector<64x4xf32>
    %c0_50 = arith.constant 0 : index
    %c0_51 = arith.constant 0 : index
    %37 = vector.load %arg7[%c0_50, %c0_51] : memref<64x4xf32, #tpu.memory_space<vmem>>, vector<64x4xf32>
    %38 = arith.addf %37, %36 : vector<64x4xf32>
    %c0_52 = arith.constant 0 : index
    %c0_53 = arith.constant 0 : index
    %39 = vector.load %arg7[%c0_52, %c0_53] : memref<64x4xf32, #tpu.memory_space<vmem>>, vector<64x4xf32>
    tpu.vector_store %arg7[%c0_52, %c0_53], %38 {strides = array<i32>} : memref<64x4xf32, #tpu.memory_space<vmem>>, vector<64x4xf32>,
    %40 = vector.extract_strided_slice %5 {offsets = [0, 0, 0], sizes = [8, 8, 4], strides = [1, 1, 1]} : vector<8x9x4xf32> to vector<8x8x4xf32>
    %41 = vector.extract_strided_slice %7 {offsets = [0, 0, 0], sizes = [8, 8, 4], strides = [1, 1, 1]} : vector<8x9x4xf32> to vector<8x8x4xf32>
    %42 = vector.extract_strided_slice %5 {offsets = [0, 1, 0], sizes = [8, 8, 4], strides = [1, 1, 1]} : vector<8x9x4xf32> to vector<8x8x4xf32>
    %43 = vector.shape_cast %40 : vector<8x8x4xf32> to vector<64x4xf32>
    %c3 = arith.constant 3 : index
    %c0_54 = arith.constant 0 : index
    %c0_55 = arith.constant 0 : index
    %44 = vector.load %arg4[%c3, %c0_54, %c0_55] : memref<9x4x4xf32, #tpu.memory_space<vmem>>, vector<1x4x4xf32>
    %45 = vector.shape_cast %44 : vector<1x4x4xf32> to vector<4x4xf32>
    %cst_56 = arith.constant dense<0.000000e+00> : vector<64x4xf32>
    %46 = tpu.matmul %43, %45, %cst_56 {dimension_numbers = #tpu.dot_dimension_numbers<[1], [0], [0], [1], [0, 0, 1, 1], [], []>} : vector<64x4xf32>, vector<4x4xf32>, vector<64x4xf32> -> vector<64x4xf32>
    %c0_57 = arith.constant 0 : index
    %c0_58 = arith.constant 0 : index
    %47 = vector.load %arg7[%c0_57, %c0_58] : memref<64x4xf32, #tpu.memory_space<vmem>>, vector<64x4xf32>
    %48 = arith.addf %47, %46 : vector<64x4xf32>
    %c0_59 = arith.constant 0 : index
    %c0_60 = arith.constant 0 : index
    %49 = vector.load %arg7[%c0_59, %c0_60] : memref<64x4xf32, #tpu.memory_space<vmem>>, vector<64x4xf32>
    tpu.vector_store %arg7[%c0_59, %c0_60], %48 {strides = array<i32>} : memref<64x4xf32, #tpu.memory_space<vmem>>, vector<64x4xf32>,
    %50 = vector.shape_cast %41 : vector<8x8x4xf32> to vector<64x4xf32>
    %c4 = arith.constant 4 : index
    %c0_61 = arith.constant 0 : index
    %c0_62 = arith.constant 0 : index
    %51 = vector.load %arg4[%c4, %c0_61, %c0_62] : memref<9x4x4xf32, #tpu.memory_space<vmem>>, vector<1x4x4xf32>
    %52 = vector.shape_cast %51 : vector<1x4x4xf32> to vector<4x4xf32>
    %cst_63 = arith.constant dense<0.000000e+00> : vector<64x4xf32>
    %53 = tpu.matmul %50, %52, %cst_63 {dimension_numbers = #tpu.dot_dimension_numbers<[1], [0], [0], [1], [0, 0, 1, 1], [], []>} : vector<64x4xf32>, vector<4x4xf32>, vector<64x4xf32> -> vector<64x4xf32>
    %c0_64 = arith.constant 0 : index
    %c0_65 = arith.constant 0 : index
    %54 = vector.load %arg7[%c0_64, %c0_65] : memref<64x4xf32, #tpu.memory_space<vmem>>, vector<64x4xf32>
    %55 = arith.addf %54, %53 : vector<64x4xf32>
    %c0_66 = arith.constant 0 : index
    %c0_67 = arith.constant 0 : index
    %56 = vector.load %arg7[%c0_66, %c0_67] : memref<64x4xf32, #tpu.memory_space<vmem>>, vector<64x4xf32>
    tpu.vector_store %arg7[%c0_66, %c0_67], %55 {strides = array<i32>} : memref<64x4xf32, #tpu.memory_space<vmem>>, vector<64x4xf32>,
    %57 = vector.shape_cast %42 : vector<8x8x4xf32> to vector<64x4xf32>
    %c5 = arith.constant 5 : index
    %c0_68 = arith.constant 0 : index
    %c0_69 = arith.constant 0 : index
    %58 = vector.load %arg4[%c5, %c0_68, %c0_69] : memref<9x4x4xf32, #tpu.memory_space<vmem>>, vector<1x4x4xf32>
    %59 = vector.shape_cast %58 : vector<1x4x4xf32> to vector<4x4xf32>
    %cst_70 = arith.constant dense<0.000000e+00> : vector<64x4xf32>
    %60 = tpu.matmul %57, %59, %cst_70 {dimension_numbers = #tpu.dot_dimension_numbers<[1], [0], [0], [1], [0, 0, 1, 1], [], []>} : vector<64x4xf32>, vector<4x4xf32>, vector<64x4xf32> -> vector<64x4xf32>
    %c0_71 = arith.constant 0 : index
    %c0_72 = arith.constant 0 : index
    %61 = vector.load %arg7[%c0_71, %c0_72] : memref<64x4xf32, #tpu.memory_space<vmem>>, vector<64x4xf32>
    %62 = arith.addf %61, %60 : vector<64x4xf32>
    %c0_73 = arith.constant 0 : index
    %c0_74 = arith.constant 0 : index
    %63 = vector.load %arg7[%c0_73, %c0_74] : memref<64x4xf32, #tpu.memory_space<vmem>>, vector<64x4xf32>
    tpu.vector_store %arg7[%c0_73, %c0_74], %62 {strides = array<i32>} : memref<64x4xf32, #tpu.memory_space<vmem>>, vector<64x4xf32>,
    %64 = vector.extract_strided_slice %14 {offsets = [0, 0, 0], sizes = [8, 8, 4], strides = [1, 1, 1]} : vector<8x9x4xf32> to vector<8x8x4xf32>
    %65 = vector.extract_strided_slice %17 {offsets = [0, 0, 0], sizes = [8, 8, 4], strides = [1, 1, 1]} : vector<8x9x4xf32> to vector<8x8x4xf32>
    %66 = vector.extract_strided_slice %14 {offsets = [0, 1, 0], sizes = [8, 8, 4], strides = [1, 1, 1]} : vector<8x9x4xf32> to vector<8x8x4xf32>
    %67 = vector.shape_cast %64 : vector<8x8x4xf32> to vector<64x4xf32>
    %c6 = arith.constant 6 : index
    %c0_75 = arith.constant 0 : index
    %c0_76 = arith.constant 0 : index
    %68 = vector.load %arg4[%c6, %c0_75, %c0_76] : memref<9x4x4xf32, #tpu.memory_space<vmem>>, vector<1x4x4xf32>
    %69 = vector.shape_cast %68 : vector<1x4x4xf32> to vector<4x4xf32>
    %cst_77 = arith.constant dense<0.000000e+00> : vector<64x4xf32>
    %70 = tpu.matmul %67, %69, %cst_77 {dimension_numbers = #tpu.dot_dimension_numbers<[1], [0], [0], [1], [0, 0, 1, 1], [], []>} : vector<64x4xf32>, vector<4x4xf32>, vector<64x4xf32> -> vector<64x4xf32>
    %c0_78 = arith.constant 0 : index
    %c0_79 = arith.constant 0 : index
    %71 = vector.load %arg7[%c0_78, %c0_79] : memref<64x4xf32, #tpu.memory_space<vmem>>, vector<64x4xf32>
    %72 = arith.addf %71, %70 : vector<64x4xf32>
    %c0_80 = arith.constant 0 : index
    %c0_81 = arith.constant 0 : index
    %73 = vector.load %arg7[%c0_80, %c0_81] : memref<64x4xf32, #tpu.memory_space<vmem>>, vector<64x4xf32>
    tpu.vector_store %arg7[%c0_80, %c0_81], %72 {strides = array<i32>} : memref<64x4xf32, #tpu.memory_space<vmem>>, vector<64x4xf32>,
    %74 = vector.shape_cast %65 : vector<8x8x4xf32> to vector<64x4xf32>
    %c7 = arith.constant 7 : index
    %c0_82 = arith.constant 0 : index
    %c0_83 = arith.constant 0 : index
    %75 = vector.load %arg4[%c7, %c0_82, %c0_83] : memref<9x4x4xf32, #tpu.memory_space<vmem>>, vector<1x4x4xf32>
    %76 = vector.shape_cast %75 : vector<1x4x4xf32> to vector<4x4xf32>
    %cst_84 = arith.constant dense<0.000000e+00> : vector<64x4xf32>
    %77 = tpu.matmul %74, %76, %cst_84 {dimension_numbers = #tpu.dot_dimension_numbers<[1], [0], [0], [1], [0, 0, 1, 1], [], []>} : vector<64x4xf32>, vector<4x4xf32>, vector<64x4xf32> -> vector<64x4xf32>
    %c0_85 = arith.constant 0 : index
    %c0_86 = arith.constant 0 : index
    %78 = vector.load %arg7[%c0_85, %c0_86] : memref<64x4xf32, #tpu.memory_space<vmem>>, vector<64x4xf32>
    %79 = arith.addf %78, %77 : vector<64x4xf32>
    %c0_87 = arith.constant 0 : index
    %c0_88 = arith.constant 0 : index
    %80 = vector.load %arg7[%c0_87, %c0_88] : memref<64x4xf32, #tpu.memory_space<vmem>>, vector<64x4xf32>
    tpu.vector_store %arg7[%c0_87, %c0_88], %79 {strides = array<i32>} : memref<64x4xf32, #tpu.memory_space<vmem>>, vector<64x4xf32>,
    %81 = vector.shape_cast %66 : vector<8x8x4xf32> to vector<64x4xf32>
    %c8 = arith.constant 8 : index
    %c0_89 = arith.constant 0 : index
    %c0_90 = arith.constant 0 : index
    %82 = vector.load %arg4[%c8, %c0_89, %c0_90] : memref<9x4x4xf32, #tpu.memory_space<vmem>>, vector<1x4x4xf32>
    %83 = vector.shape_cast %82 : vector<1x4x4xf32> to vector<4x4xf32>
    %cst_91 = arith.constant dense<0.000000e+00> : vector<64x4xf32>
    %84 = tpu.matmul %81, %83, %cst_91 {dimension_numbers = #tpu.dot_dimension_numbers<[1], [0], [0], [1], [0, 0, 1, 1], [], []>} : vector<64x4xf32>, vector<4x4xf32>, vector<64x4xf32> -> vector<64x4xf32>
    %c0_92 = arith.constant 0 : index
    %c0_93 = arith.constant 0 : index
    %85 = vector.load %arg7[%c0_92, %c0_93] : memref<64x4xf32, #tpu.memory_space<vmem>>, vector<64x4xf32>
    %86 = arith.addf %85, %84 : vector<64x4xf32>
    %c0_94 = arith.constant 0 : index
    %c0_95 = arith.constant 0 : index
    %87 = vector.load %arg7[%c0_94, %c0_95] : memref<64x4xf32, #tpu.memory_space<vmem>>, vector<64x4xf32>
    tpu.vector_store %arg7[%c0_94, %c0_95], %86 {strides = array<i32>} : memref<64x4xf32, #tpu.memory_space<vmem>>, vector<64x4xf32>,
    %c0_96 = arith.constant 0 : index
    %c0_97 = arith.constant 0 : index
    %88 = vector.load %arg7[%c0_96, %c0_97] : memref<64x4xf32, #tpu.memory_space<vmem>>, vector<64x4xf32>
    %c0_98 = arith.constant 0 : index
    %c0_99 = arith.constant 0 : index
    %89 = vector.load %arg5[%c0_98, %c0_99] : memref<1x4xf32, #tpu.memory_space<vmem>>, vector<1x4xf32>
    %90 = vector.broadcast %89 : vector<1x4xf32> to vector<64x4xf32>
    %91 = arith.addf %88, %90 : vector<64x4xf32>
    %92 = vector.shape_cast %91 : vector<64x4xf32> to vector<8x8x4xf32>
    %c0_100 = arith.constant 0 : index
    %c0_101 = arith.constant 0 : index
    %c0_102 = arith.constant 0 : index
    %c0_103 = arith.constant 0 : index
    %93 = vector.load %arg6[%c0_100, %c0_101, %c0_102, %c0_103] : memref<1x8x8x4xf32, #tpu.memory_space<vmem>>, vector<1x8x8x4xf32>
    %94 = vector.shape_cast %93 : vector<1x8x8x4xf32> to vector<8x8x4xf32>
    %95 = vector.shape_cast %92 : vector<8x8x4xf32> to vector<1x8x8x4xf32>
    tpu.vector_store %arg6[%c0_100, %c0_101, %c0_102, %c0_103], %95 {strides = array<i32>} : memref<1x8x8x4xf32, #tpu.memory_space<vmem>>, vector<1x8x8x4xf32>,
    return
  }
  func.func @transform_0(%arg0: i32, %arg1: i32) -> (i32, i32, i32, i32, i32, i32) {
    %c0_i32 = arith.constant 0 : i32
    %c0_i32_0 = arith.constant 0 : i32
    %c0_i32_1 = arith.constant 0 : i32
    %c0_i32_2 = arith.constant 0 : i32
    %c0_i32_3 = arith.constant 0 : i32
    return %arg0, %c0_i32, %c0_i32_0, %arg1, %c0_i32_1, %c0_i32_2 : i32, i32, i32, i32, i32, i32
  }
  func.func @transform_1(%arg0: i32, %arg1: i32) -> (i32, i32, i32, i32, i32, i32) {
    %c1_i32 = arith.constant 1 : i32
    %0 = arith.addi %arg1, %c1_i32 : i32
    %c8_i32 = arith.constant 8 : i32
    %1 = arith.muli %0, %c8_i32 : i32
    %c0_i32 = arith.constant 0 : i32
    %c0_i32_0 = arith.constant 0 : i32
    %c0_i32_1 = arith.constant 0 : i32
    %c0_i32_2 = arith.constant 0 : i32
    %c0_i32_3 = arith.constant 0 : i32
    return %arg0, %c0_i32, %c0_i32_0, %1, %c0_i32_1, %c0_i32_2 : i32, i32, i32, i32, i32, i32
  }
  func.func @transform_2(%arg0: i32, %arg1: i32) -> (i32, i32, i32) {
    %c0_i32 = arith.constant 0 : i32
    %c0_i32_0 = arith.constant 0 : i32
    %c0_i32_1 = arith.constant 0 : i32
    %c0_i32_2 = arith.constant 0 : i32
    return %c0_i32, %c0_i32_0, %c0_i32_1 : i32, i32, i32
  }
  func.func @transform_3(%arg0: i32, %arg1: i32) -> (i32, i32) {
    %c0_i32 = arith.constant 0 : i32
    %c0_i32_0 = arith.constant 0 : i32
    %c0_i32_1 = arith.constant 0 : i32
    return %c0_i32, %c0_i32_0 : i32, i32
  }
  func.func @transform_4(%arg0: i32, %arg1: i32) -> (i32, i32, i32, i32) {
    %c0_i32 = arith.constant 0 : i32
    %c0_i32_0 = arith.constant 0 : i32
    %c0_i32_1 = arith.constant 0 : i32
    return %arg0, %arg1, %c0_i32, %c0_i32_0 : i32, i32, i32, i32
  }
}

</mosaic_0001>

<llo_original>
// kernel: tpu_custom_call.1
$region0: #{tpu_custom_call.1}
  #allocation0 [shape = 'u32[]', space=smem, size = 0x4, offset = 0x4, fixed_abs, tag = 'smem constant byte address 0x4 - core index']
  #allocation1 [shape = 'u32[144,128]{1,0:T(1,128)}', space=vmem, size = 0x12000, scoped, tag = 'internal scratch']
  #allocation2 [shape = 'f32[64,4]{1,0:T(8,128)}', space=vmem, size = 0x8000, scoped, tag = 'scratch operand']
  %s0 = inlined_call_operand.vmem [shape: f32[2,2,2,9,9,4], index: 0, kind: input, shape index: {}]
  %s1 = inlined_call_operand.vmem [shape: f32[2,2,2,9,9,4], index: 1, kind: input, shape index: {}]
  %s2 = inlined_call_operand.vmem [shape: f32[9,4,4], index: 2, kind: input, shape index: {}]
  %s3 = inlined_call_operand.vmem [shape: f32[1,4], index: 3, kind: input, shape index: {}]
  %s4 = inlined_call_operand.vmem [shape: f32[2,8,8,4], index: 4, kind: output, shape index: {}]
  %s5 = sld [smem:[#allocation0]]
  $region139: #{tpu_custom_call.1} parent=0
    _
  %s7 = ssub.s32 1, %s5
  %s8 = scalar_select 0, %s7, %s5
  $region1: #{tpu_custom_call.1} parent=0
    #allocation3 [shape = 'u8[524288]{0}', space=vmem, size = 0x80000, scoped, tag = 'input window, operand 0']
    #allocation4 [shape = 'u8[32768]{0}', space=vmem, size = 0x8000, scoped, tag = 'input window, operand 1']
    loop: start=0, step=1, limit=4
    $region2: #{tpu_custom_call.1} parent=1 // loop_pre_header
      _
    $region3: #{tpu_custom_call.1} parent=1 // loop_header
      %s10 = sphi 0, %s14
      %p11 = scmp.ge.s32.totalorder %s10, 4
      %s17 = sphi 0, %s29
      %s18 = sphi 0, %s25
      %s19 = sphi 0, %s17
      %s20 = sphi 0, %s18
      %s21 = sphi 0, %s19
      %s22 = sphi 0, %s20
      %s34 = sphi 0, %s36
      %s37 = sphi 0, %s34
      %s38 = sphi 0, %s37
      %s54 = sphi 0, %s38
      %s66 = sphi 0, %s68
      %s69 = sphi 0, %s66
      %s70 = sphi 0, %s69
      %s86 = sphi 0, %s70
      %s90 = sphi 0, %s90
      %s92 = sphi 0, %s90
      %s93 = sphi 0, %s92
      %s107 = sphi 0, %s93
      %s111 = sphi 0, %s111
      %s113 = sphi 0, %s111
      %s114 = sphi 0, %s113
      %s128 = sphi 0, %s114
      %s136 = sphi 0, %s138
      %s139 = sphi 0, %s136
      %s140 = sphi 0, %s139
      %s156 = sphi 0, %s140
    $region4: #{tpu_custom_call.1} parent=1 // loop_header_branch
      %13 = sbr.rel (%p11) target = $region8
    $region5: #{tpu_custom_call.1} parent=1 // loop_body
      %s15 = ssub.s32 %s10, 1
      %s16 = ssub.s32 %s10, 2
      %s23 = sadd.s32 1, %s18
      %p24 = scmp.ge.s32.totalorder %s23, 1
      %s25 = scalar_select %p24, 0, %s23
      %s26 = sadd.s32 1, %s17
      %s27 = scalar_select %p24, %s26, %s17
      %p28 = scmp.ge.s32.totalorder %s27, 2
      %s29 = scalar_select %p28, 0, %s27
      %s30 = ssub.s32 %s17, %s29
      %s31 = ssub.s32 %s18, %s25
      %s32 = sor.u32 %s30, %s31
      %p33 = scmp.eq.s32.totalorder %s32, 0
      %s35 = sadd.s32 %s34, 1
      %s36 = scalar_select %p33, %s34, %s35
      %p39 = pneg %p33
      %p40 = scmp.eq.s32.totalorder %s10, 1
      %p41 = por %p39, %p40
      %p42 = scmp.ne.s32.totalorder %s34, %s37
      %p43 = scmp.eq.s32.totalorder %s10, 0
      %p44 = por %p42, %p43
      %p45 = scmp.ne.s32.totalorder %s34, %s37
      %p46 = scmp.eq.s32.totalorder %s15, 1
      %p47 = por %p45, %p46
      %p48 = scmp.ne.s32.totalorder %s37, %s38
      %p49 = scmp.eq.s32.totalorder %s15, 0
      %p50 = por %p48, %p49
      %p51 = scmp.ne.s32.totalorder %s37, %s38
      %p52 = scmp.eq.s32.totalorder %s16, 1
      %p53 = por %p51, %p52
      %p55 = scmp.ne.s32.totalorder %s38, %s54
      %p56 = scmp.eq.s32.totalorder %s16, 0
      %p57 = por %p55, %p56
      %s58 = sadd.s32 %s18, 1
      %s59 = smul.u32 %s58, 8
      %s60 = sadd.s32 %s25, 1
      %s61 = smul.u32 %s60, 8
      %s62 = ssub.s32 %s17, %s29
      %s63 = ssub.s32 %s59, %s61
      %s64 = sor.u32 %s62, %s63
      %p65 = scmp.eq.s32.totalorder %s64, 0
      %s67 = sadd.s32 %s66, 1
      %s68 = scalar_select %p65, %s66, %s67
      %p71 = pneg %p65
      %p72 = scmp.eq.s32.totalorder %s10, 1
      %p73 = por %p71, %p72
      %p74 = scmp.ne.s32.totalorder %s66, %s69
      %p75 = scmp.eq.s32.totalorder %s10, 0
      %p76 = por %p74, %p75
      %p77 = scmp.ne.s32.totalorder %s66, %s69
      %p78 = scmp.eq.s32.totalorder %s15, 1
      %p79 = por %p77, %p78
      %p80 = scmp.ne.s32.totalorder %s69, %s70
      %p81 = scmp.eq.s32.totalorder %s15, 0
      %p82 = por %p80, %p81
      %p83 = scmp.ne.s32.totalorder %s69, %s70
      %p84 = scmp.eq.s32.totalorder %s16, 1
      %p85 = por %p83, %p84
      %p87 = scmp.ne.s32.totalorder %s70, %s86
      %p88 = scmp.eq.s32.totalorder %s16, 0
      %p89 = por %p87, %p88
      %s91 = sadd.s32 %s90, 1
      %p94 = scmp.eq.s32.totalorder %s10, 1
      %p95 = scmp.ne.s32.totalorder %s90, %s92
      %p96 = scmp.eq.s32.totalorder %s10, 0
      %p97 = por %p95, %p96
      %p98 = scmp.ne.s32.totalorder %s90, %s92
      %p99 = scmp.eq.s32.totalorder %s15, 1
      %p100 = por %p98, %p99
      %p101 = scmp.ne.s32.totalorder %s92, %s93
      %p102 = scmp.eq.s32.totalorder %s15, 0
      %p103 = por %p101, %p102
      %p104 = scmp.ne.s32.totalorder %s92, %s93
      %p105 = scmp.eq.s32.totalorder %s16, 1
      %p106 = por %p104, %p105
      %p108 = scmp.ne.s32.totalorder %s93, %s107
      %p109 = scmp.eq.s32.totalorder %s16, 0
      %p110 = por %p108, %p109
      %s112 = sadd.s32 %s111, 1
      %p115 = scmp.eq.s32.totalorder %s10, 1
      %p116 = scmp.ne.s32.totalorder %s111, %s113
      %p117 = scmp.eq.s32.totalorder %s10, 0
      %p118 = por %p116, %p117
      %p119 = scmp.ne.s32.totalorder %s111, %s113
      %p120 = scmp.eq.s32.totalorder %s15, 1
      %p121 = por %p119, %p120
      %p122 = scmp.ne.s32.totalorder %s113, %s114
      %p123 = scmp.eq.s32.totalorder %s15, 0
      %p124 = por %p122, %p123
      %p125 = scmp.ne.s32.totalorder %s113, %s114
      %p126 = scmp.eq.s32.totalorder %s16, 1
      %p127 = por %p125, %p126
      %p129 = scmp.ne.s32.totalorder %s114, %s128
      %p130 = scmp.eq.s32.totalorder %s16, 0
      %p131 = por %p129, %p130
      %s132 = ssub.s32 %s17, %s29
      %s133 = ssub.s32 %s18, %s25
      %s134 = sor.u32 %s132, %s133
      %p135 = scmp.eq.s32.totalorder %s134, 0
      %s137 = sadd.s32 %s136, 1
      %s138 = scalar_select %p135, %s136, %s137
      %p141 = pneg %p135
      %p142 = scmp.eq.s32.totalorder %s10, 1
      %p143 = por %p141, %p142
      %p144 = scmp.ne.s32.totalorder %s136, %s139
      %p145 = scmp.eq.s32.totalorder %s10, 0
      %p146 = por %p144, %p145
      %p147 = scmp.ne.s32.totalorder %s136, %s139
      %p148 = scmp.eq.s32.totalorder %s15, 1
      %p149 = por %p147, %p148
      %p150 = scmp.ne.s32.totalorder %s139, %s140
      %p151 = scmp.eq.s32.totalorder %s15, 0
      %p152 = por %p150, %p151
      %p153 = scmp.ne.s32.totalorder %s139, %s140
      %p154 = scmp.eq.s32.totalorder %s16, 1
      %p155 = por %p153, %p154
      %p157 = scmp.ne.s32.totalorder %s140, %s156
      %p158 = scmp.eq.s32.totalorder %s16, 0
      %p159 = por %p157, %p158
      %p160 = scmp.le.s32.totalorder 1, %s10
      %p161 = scmp.lt.s32.totalorder %s10, 3
      %p162 = pnand %p160, %p161
      %p163 = pneg %p162
      // Predicated region
      $region9: #{tpu_custom_call.1} parent=5 // pred_check
        _
      $region10: #{tpu_custom_call.1} parent=5 // pred_check_branch
        %165 = sbr.rel (%p162) target = $region12
      $region11: #{tpu_custom_call.1} parent=5 // pred_region
        %s166 = ssub.s32 %s10, 1
        // Predicated region
        $region13: #{tpu_custom_call.1} parent=11 // pred_check
          %p167 = pneg %p103
        $region14: #{tpu_custom_call.1} parent=11 // pred_check_branch
          %169 = sbr.rel (%p167) target = $region16
        $region15: #{tpu_custom_call.1} parent=11 // pred_region
          _
        $region16: #{tpu_custom_call.1} parent=11 // pred_fallthru
          _
        // Predicated region
        $region17: #{tpu_custom_call.1} parent=11 // pred_check
          %p170 = pneg %p124
        $region18: #{tpu_custom_call.1} parent=11 // pred_check_branch
          %172 = sbr.rel (%p170) target = $region20
        $region19: #{tpu_custom_call.1} parent=11 // pred_region
          _
        $region20: #{tpu_custom_call.1} parent=11 // pred_fallthru
          _
      $region12: #{tpu_custom_call.1} parent=5 // pred_fallthru
        _
      %p173 = scmp.lt.s32.totalorder %s10, 2
      // Predicated region
      $region21: #{tpu_custom_call.1} parent=5 // pred_check
        %p174 = pneg %p173
      $region22: #{tpu_custom_call.1} parent=5 // pred_check_branch
        %176 = sbr.rel (%p174) target = $region24
      $region23: #{tpu_custom_call.1} parent=5 // pred_region
        // Predicated region
        $region25: #{tpu_custom_call.1} parent=23 // pred_check
          %p177 = pneg %p44
        $region26: #{tpu_custom_call.1} parent=23 // pred_check_branch
          %179 = sbr.rel (%p177) target = $region28
        $region27: #{tpu_custom_call.1} parent=23 // pred_region
          %s180 = sand.u32 %s34, 1
          %s181 = sand.u32 %s34, 1
          %s182 = smul.addr %s181, 512
          %s183 = scalar_lea.vmem [#allocation3], %s182
          %s184 = smul.u32 8, %s18
          %s185 = ssub.s32 9, %s184
          %p186 = scmp.lt.s32.totalorder %s185, 8
          %s187 = scalar_select %p186, %s185, 8
          %s188 = smul.u32 512, %s187
          %s189 = smul.u32 %s188, 2
          %p190 = scmp.ne.s32.totalorder 0, %s189
          %s191 = smul.addr %s184, 2
          %s192 = smul.addr %s17, 72
          %s193 = sadd.s32 %s191, %s192
          %s194 = smul.addr %s193, 8
          %s195 = scalar_lea.vmem %s0, %s194
          %s196 = smul.u32 %s187, 2
          // Predicated region
          $region29: #{tpu_custom_call.1} parent=27 // pred_check
            %p197 = pneg %p190
          $region30: #{tpu_custom_call.1} parent=27 // pred_check_branch
            %199 = sbr.rel (%p197) target = $region32
          $region31: #{tpu_custom_call.1} parent=27 // pred_region
            // Predicated region
            $region33: #{tpu_custom_call.1} parent=31 // pred_check
              _
            $region34: #{tpu_custom_call.1} parent=31 // pred_check_branch
              %201 = sbr.rel (0) target = $region36
            $region35: #{tpu_custom_call.1} parent=31 // pred_region
              // Predicated region
              $region55: #{tpu_custom_call.1} parent=35 // pred_check
                _
              $region56: #{tpu_custom_call.1} parent=35 // pred_check_branch
                %382 = sbr.rel (0) target = $region58
              $region57: #{tpu_custom_call.1} parent=35 // pred_region
                %s383 = sshrl.u32 %s196, 4
                // While loop
                $region59: #{tpu_custom_call.1} parent=57 // loop_pre_header
                  _
                $region60: #{tpu_custom_call.1} parent=57 // loop_header
                  %s385 = sphi 0, %s387
                  %p386 = scmp.ge.s32.totalorder %s385, %s383
                  %s390 = sphi 0, %s523
                  %s391 = sphi %s195, %s526
                  %s392 = sphi %s183, %s527
                $region61: #{tpu_custom_call.1} parent=57 // loop_header_branch
                  %389 = sbr.rel (%p386) target = $region65
                $region62: #{tpu_custom_call.1} parent=57 // loop_body
                  %v393 = vld [vmem:[%s391] sm:$0xff]
                  %394 = vst [vmem:[%s392] sm:$0xff] %v393
                  %v395 = vld [vmem:[%s391 + $0x8] sm:$0xff]
                  %396 = vst [vmem:[%s392 + $0x8] sm:$0xff] %v395
                  %v397 = vld [vmem:[%s391 + $0x10] sm:$0xff]
                  %398 = vst [vmem:[%s392 + $0x10] sm:$0xff] %v397
                  %v399 = vld [vmem:[%s391 + $0x18] sm:$0xff]
                  %400 = vst [vmem:[%s392 + $0x18] sm:$0xff] %v399
                  %v401 = vld [vmem:[%s391 + $0x20] sm:$0xff]
                  %402 = vst [vmem:[%s392 + $0x20] sm:$0xff] %v401
                  %v403 = vld [vmem:[%s391 + $0x28] sm:$0xff]
                  %404 = vst [vmem:[%s392 + $0x28] sm:$0xff] %v403
                  %v405 = vld [vmem:[%s391 + $0x30] sm:$0xff]
                  %406 = vst [vmem:[%s392 + $0x30] sm:$0xff] %v405
                  %v407 = vld [vmem:[%s391 + $0x38] sm:$0xff]
                  %408 = vst [vmem:[%s392 + $0x38] sm:$0xff] %v407
                  %v409 = vld [vmem:[%s391 + $0x40] sm:$0xff]
                  %410 = vst [vmem:[%s392 + $0x40] sm:$0xff] %v409
                  %v411 = vld [vmem:[%s391 + $0x48] sm:$0xff]
                  %412 = vst [vmem:[%s392 + $0x48] sm:$0xff] %v411
                  %v413 = vld [vmem:[%s391 + $0x50] sm:$0xff]
                  %414 = vst [vmem:[%s392 + $0x50] sm:$0xff] %v413
                  %v415 = vld [vmem:[%s391 + $0x58] sm:$0xff]
                  %416 = vst [vmem:[%s392 + $0x58] sm:$0xff] %v415
                  %v417 = vld [vmem:[%s391 + $0x60] sm:$0xff]
                  %418 = vst [vmem:[%s392 + $0x60] sm:$0xff] %v417
                  %v419 = vld [vmem:[%s391 + $0x68] sm:$0xff]
                  %420 = vst [vmem:[%s392 + $0x68] sm:$0xff] %v419
                  %v421 = vld [vmem:[%s391 + $0x70] sm:$0xff]
                  %422 = vst [vmem:[%s392 + $0x70] sm:$0xff] %v421
                  %v423 = vld [vmem:[%s391 + $0x78] sm:$0xff]
                  %424 = vst [vmem:[%s392 + $0x78] sm:$0xff] %v423
                  %v425 = vld [vmem:[%s391 + $0x90] sm:$0xff]
                  %426 = vst [vmem:[%s392 + $0x80] sm:$0xff] %v425
                  %v427 = vld [vmem:[%s391 + $0x98] sm:$0xff]
                  %428 = vst [vmem:[%s392 + $0x88] sm:$0xff] %v427
                  %v429 = vld [vmem:[%s391 + $0xa0] sm:$0xff]
                  %430 = vst [vmem:[%s392 + $0x90] sm:$0xff] %v429
                  %v431 = vld [vmem:[%s391 + $0xa8] sm:$0xff]
                  %432 = vst [vmem:[%s392 + $0x98] sm:$0xff] %v431
                  %v433 = vld [vmem:[%s391 + $0xb0] sm:$0xff]
                  %434 = vst [vmem:[%s392 + $0xa0] sm:$0xff] %v433
                  %v435 = vld [vmem:[%s391 + $0xb8] sm:$0xff]
                  %436 = vst [vmem:[%s392 + $0xa8] sm:$0xff] %v435
                  %v437 = vld [vmem:[%s391 + $0xc0] sm:$0xff]
                  %438 = vst [vmem:[%s392 + $0xb0] sm:$0xff] %v437
                  %v439 = vld [vmem:[%s391 + $0xc8] sm:$0xff]
                  %440 = vst [vmem:[%s392 + $0xb8] sm:$0xff] %v439
                  %v441 = vld [vmem:[%s391 + $0xd0] sm:$0xff]
                  %442 = vst [vmem:[%s392 + $0xc0] sm:$0xff] %v441
                  %v443 = vld [vmem:[%s391 + $0xd8] sm:$0xff]
                  %444 = vst [vmem:[%s392 + $0xc8] sm:$0xff] %v443
                  %v445 = vld [vmem:[%s391 + $0xe0] sm:$0xff]
                  %446 = vst [vmem:[%s392 + $0xd0] sm:$0xff] %v445
                  %v447 = vld [vmem:[%s391 + $0xe8] sm:$0xff]
                  %448 = vst [vmem:[%s392 + $0xd8] sm:$0xff] %v447
                  %v449 = vld [vmem:[%s391 + $0xf0] sm:$0xff]
                  %450 = vst [vmem:[%s392 + $0xe0] sm:$0xff] %v449
                  %v451 = vld [vmem:[%s391 + $0xf8] sm:$0xff]
                  %452 = vst [vmem:[%s392 + $0xe8] sm:$0xff] %v451
                  %v453 = vld [vmem:[%s391 + $0x100] sm:$0xff]
                  %454 = vst [vmem:[%s392 + $0xf0] sm:$0xff] %v453
                  %v455 = vld [vmem:[%s391 + $0x108] sm:$0xff]
                  %456 = vst [vmem:[%s392 + $0xf8] sm:$0xff] %v455
                  %v457 = vld [vmem:[%s391 + $0x120] sm:$0xff]
                  %458 = vst [vmem:[%s392 + $0x100] sm:$0xff] %v457
                  %v459 = vld [vmem:[%s391 + $0x128] sm:$0xff]
                  %460 = vst [vmem:[%s392 + $0x108] sm:$0xff] %v459
                  %v461 = vld [vmem:[%s391 + $0x130] sm:$0xff]
                  %462 = vst [vmem:[%s392 + $0x110] sm:$0xff] %v461
                  %v463 = vld [vmem:[%s391 + $0x138] sm:$0xff]
                  %464 = vst [vmem:[%s392 + $0x118] sm:$0xff] %v463
                  %v465 = vld [vmem:[%s391 + $0x140] sm:$0xff]
                  %466 = vst [vmem:[%s392 + $0x120] sm:$0xff] %v465
                  %v467 = vld [vmem:[%s391 + $0x148] sm:$0xff]
                  %468 = vst [vmem:[%s392 + $0x128] sm:$0xff] %v467
                  %v469 = vld [vmem:[%s391 + $0x150] sm:$0xff]
                  %470 = vst [vmem:[%s392 + $0x130] sm:$0xff] %v469
                  %v471 = vld [vmem:[%s391 + $0x158] sm:$0xff]
                  %472 = vst [vmem:[%s392 + $0x138] sm:$0xff] %v471
                  %v473 = vld [vmem:[%s391 + $0x160] sm:$0xff]
                  %474 = vst [vmem:[%s392 + $0x140] sm:$0xff] %v473
                  %v475 = vld [vmem:[%s391 + $0x168] sm:$0xff]
                  %476 = vst [vmem:[%s392 + $0x148] sm:$0xff] %v475
                  %v477 = vld [vmem:[%s391 + $0x170] sm:$0xff]
                  %478 = vst [vmem:[%s392 + $0x150] sm:$0xff] %v477
                  %v479 = vld [vmem:[%s391 + $0x178] sm:$0xff]
                  %480 = vst [vmem:[%s392 + $0x158] sm:$0xff] %v479
                  %v481 = vld [vmem:[%s391 + $0x180] sm:$0xff]
                  %482 = vst [vmem:[%s392 + $0x160] sm:$0xff] %v481
                  %v483 = vld [vmem:[%s391 + $0x188] sm:$0xff]
                  %484 = vst [vmem:[%s392 + $0x168] sm:$0xff] %v483
                  %v485 = vld [vmem:[%s391 + $0x190] sm:$0xff]
                  %486 = vst [vmem:[%s392 + $0x170] sm:$0xff] %v485
                  %v487 = vld [vmem:[%s391 + $0x198] sm:$0xff]
                  %488 = vst [vmem:[%s392 + $0x178] sm:$0xff] %v487
                  %v489 = vld [vmem:[%s391 + $0x1b0] sm:$0xff]
                  %490 = vst [vmem:[%s392 + $0x180] sm:$0xff] %v489
                  %v491 = vld [vmem:[%s391 + $0x1b8] sm:$0xff]
                  %492 = vst [vmem:[%s392 + $0x188] sm:$0xff] %v491
                  %v493 = vld [vmem:[%s391 + $0x1c0] sm:$0xff]
                  %494 = vst [vmem:[%s392 + $0x190] sm:$0xff] %v493
                  %v495 = vld [vmem:[%s391 + $0x1c8] sm:$0xff]
                  %496 = vst [vmem:[%s392 + $0x198] sm:$0xff] %v495
                  %v497 = vld [vmem:[%s391 + $0x1d0] sm:$0xff]
                  %498 = vst [vmem:[%s392 + $0x1a0] sm:$0xff] %v497
                  %v499 = vld [vmem:[%s391 + $0x1d8] sm:$0xff]
                  %500 = vst [vmem:[%s392 + $0x1a8] sm:$0xff] %v499
                  %v501 = vld [vmem:[%s391 + $0x1e0] sm:$0xff]
                  %502 = vst [vmem:[%s392 + $0x1b0] sm:$0xff] %v501
                  %v503 = vld [vmem:[%s391 + $0x1e8] sm:$0xff]
                  %504 = vst [vmem:[%s392 + $0x1b8] sm:$0xff] %v503
                  %v505 = vld [vmem:[%s391 + $0x1f0] sm:$0xff]
                  %506 = vst [vmem:[%s392 + $0x1c0] sm:$0xff] %v505
                  %v507 = vld [vmem:[%s391 + $0x1f8] sm:$0xff]
                  %508 = vst [vmem:[%s392 + $0x1c8] sm:$0xff] %v507
                  %v509 = vld [vmem:[%s391 + $0x200] sm:$0xff]
                  %510 = vst [vmem:[%s392 + $0x1d0] sm:$0xff] %v509
                  %v511 = vld [vmem:[%s391 + $0x208] sm:$0xff]
                  %512 = vst [vmem:[%s392 + $0x1d8] sm:$0xff] %v511
                  %v513 = vld [vmem:[%s391 + $0x210] sm:$0xff]
                  %514 = vst [vmem:[%s392 + $0x1e0] sm:$0xff] %v513
                  %v515 = vld [vmem:[%s391 + $0x218] sm:$0xff]
                  %516 = vst [vmem:[%s392 + $0x1e8] sm:$0xff] %v515
                  %v517 = vld [vmem:[%s391 + $0x220] sm:$0xff]
                  %518 = vst [vmem:[%s392 + $0x1f0] sm:$0xff] %v517
                  %v519 = vld [vmem:[%s391 + $0x228] sm:$0xff]
                  %520 = vst [vmem:[%s392 + $0x1f8] sm:$0xff] %v519
                  %s521 = sadd.s32 1, %s390
                  %p522 = scmp.ge.s32.totalorder %s521, %s383
                  %s523 = scalar_select %p522, 0, %s521
                  %s524 = smul.u32 %s523, 128
                  %s525 = smul.u32 %s523, 128
                  %s526 = scalar_lea.vmem %s195, %s524
                  %s527 = scalar_lea.vmem %s183, %s525 [#allocation3]
                $region63: #{tpu_custom_call.1} parent=57 // loop_footer
                  %s387 = sadd.s32 %s385, 1
                $region64: #{tpu_custom_call.1} parent=57 // loop_footer_branch
                  %384 = sbr.rel target = $region60
                $region65: #{tpu_custom_call.1} parent=57 // loop_exit
                  _
                %s528 = sshrl.u32 %s196, 4
                %s529 = sand.u32 %s196, 15
                %s530 = smul.u32 %s528, 16
                %s531 = smul.u32 8, %s530
                %s532 = scalar_lea.vmem %s195, %s531
                %s533 = smul.u32 8, %s530
                %s534 = scalar_lea.vmem %s183, %s533 [#allocation3]
                // While loop
                $region66: #{tpu_custom_call.1} parent=57 // loop_pre_header
                  _
                $region67: #{tpu_custom_call.1} parent=57 // loop_header
                  %s536 = sphi 0, %s538
                  %p537 = scmp.ge.s32.totalorder %s536, %s529
                  %s541 = sphi 0, %s554
                  %s542 = sphi %s532, %s557
                  %s543 = sphi %s534, %s558
                $region68: #{tpu_custom_call.1} parent=57 // loop_header_branch
                  %540 = sbr.rel (%p537) target = $region72
                $region69: #{tpu_custom_call.1} parent=57 // loop_body
                  %v544 = vld [vmem:[%s542] sm:$0xff]
                  %545 = vst [vmem:[%s543] sm:$0xff] %v544
                  %v546 = vld [vmem:[%s542 + $0x90] sm:$0xff]
                  %547 = vst [vmem:[%s543 + $0x80] sm:$0xff] %v546
                  %v548 = vld [vmem:[%s542 + $0x120] sm:$0xff]
                  %549 = vst [vmem:[%s543 + $0x100] sm:$0xff] %v548
                  %v550 = vld [vmem:[%s542 + $0x1b0] sm:$0xff]
                  %551 = vst [vmem:[%s543 + $0x180] sm:$0xff] %v550
                  %s552 = sadd.s32 1, %s541
                  %p553 = scmp.ge.s32.totalorder %s552, %s529
                  %s554 = scalar_select %p553, 0, %s552
                  %s555 = smul.u32 %s554, 8
                  %s556 = smul.u32 %s554, 8
                  %s557 = scalar_lea.vmem %s532, %s555
                  %s558 = scalar_lea.vmem %s534, %s556 [#allocation3]
                $region70: #{tpu_custom_call.1} parent=57 // loop_footer
                  %s538 = sadd.s32 %s536, 1
                $region71: #{tpu_custom_call.1} parent=57 // loop_footer_branch
                  %535 = sbr.rel target = $region67
                $region72: #{tpu_custom_call.1} parent=57 // loop_exit
                  _
              $region58: #{tpu_custom_call.1} parent=35 // pred_fallthru
                _
              // Predicated region
              $region73: #{tpu_custom_call.1} parent=35 // pred_check
                _
              $region74: #{tpu_custom_call.1} parent=35 // pred_check_branch
                %560 = sbr.rel target = $region76
              $region75: #{tpu_custom_call.1} parent=35 // pred_region
                _
              $region76: #{tpu_custom_call.1} parent=35 // pred_fallthru
                _
            $region36: #{tpu_custom_call.1} parent=31 // pred_fallthru
              _
            // Predicated region
            $region37: #{tpu_custom_call.1} parent=31 // pred_check
              _
            $region38: #{tpu_custom_call.1} parent=31 // pred_check_branch
              %203 = sbr.rel target = $region40
            $region39: #{tpu_custom_call.1} parent=31 // pred_region
              %s205 = sshrl.u32 %s196, 4
              // While loop
              $region41: #{tpu_custom_call.1} parent=39 // loop_pre_header
                _
              $region42: #{tpu_custom_call.1} parent=39 // loop_header
                %s207 = sphi 0, %s209
                %p208 = scmp.ge.s32.totalorder %s207, %s205
                %s212 = sphi 0, %s345
                %s213 = sphi %s195, %s348
                %s214 = sphi %s183, %s349
              $region43: #{tpu_custom_call.1} parent=39 // loop_header_branch
                %211 = sbr.rel (%p208) target = $region47
              $region44: #{tpu_custom_call.1} parent=39 // loop_body
                %v215 = vld [vmem:[%s213] sm:$0xff]
                %216 = vst [vmem:[%s214] sm:$0xff] %v215
                %v217 = vld [vmem:[%s213 + $0x8] sm:$0xff]
                %218 = vst [vmem:[%s214 + $0x8] sm:$0xff] %v217
                %v219 = vld [vmem:[%s213 + $0x10] sm:$0xff]
                %220 = vst [vmem:[%s214 + $0x10] sm:$0xff] %v219
                %v221 = vld [vmem:[%s213 + $0x18] sm:$0xff]
                %222 = vst [vmem:[%s214 + $0x18] sm:$0xff] %v221
                %v223 = vld [vmem:[%s213 + $0x20] sm:$0xff]
                %224 = vst [vmem:[%s214 + $0x20] sm:$0xff] %v223
                %v225 = vld [vmem:[%s213 + $0x28] sm:$0xff]
                %226 = vst [vmem:[%s214 + $0x28] sm:$0xff] %v225
                %v227 = vld [vmem:[%s213 + $0x30] sm:$0xff]
                %228 = vst [vmem:[%s214 + $0x30] sm:$0xff] %v227
                %v229 = vld [vmem:[%s213 + $0x38] sm:$0xff]
                %230 = vst [vmem:[%s214 + $0x38] sm:$0xff] %v229
                %v231 = vld [vmem:[%s213 + $0x40] sm:$0xff]
                %232 = vst [vmem:[%s214 + $0x40] sm:$0xff] %v231
                %v233 = vld [vmem:[%s213 + $0x48] sm:$0xff]
                %234 = vst [vmem:[%s214 + $0x48] sm:$0xff] %v233
                %v235 = vld [vmem:[%s213 + $0x50] sm:$0xff]
                %236 = vst [vmem:[%s214 + $0x50] sm:$0xff] %v235
                %v237 = vld [vmem:[%s213 + $0x58] sm:$0xff]
                %238 = vst [vmem:[%s214 + $0x58] sm:$0xff] %v237
                %v239 = vld [vmem:[%s213 + $0x60] sm:$0xff]
                %240 = vst [vmem:[%s214 + $0x60] sm:$0xff] %v239
                %v241 = vld [vmem:[%s213 + $0x68] sm:$0xff]
                %242 = vst [vmem:[%s214 + $0x68] sm:$0xff] %v241
                %v243 = vld [vmem:[%s213 + $0x70] sm:$0xff]
                %244 = vst [vmem:[%s214 + $0x70] sm:$0xff] %v243
                %v245 = vld [vmem:[%s213 + $0x78] sm:$0xff]
                %246 = vst [vmem:[%s214 + $0x78] sm:$0xff] %v245
                %v247 = vld [vmem:[%s213 + $0x90] sm:$0xff]
                %248 = vst [vmem:[%s214 + $0x80] sm:$0xff] %v247
                %v249 = vld [vmem:[%s213 + $0x98] sm:$0xff]
                %250 = vst [vmem:[%s214 + $0x88] sm:$0xff] %v249
                %v251 = vld [vmem:[%s213 + $0xa0] sm:$0xff]
                %252 = vst [vmem:[%s214 + $0x90] sm:$0xff] %v251
                %v253 = vld [vmem:[%s213 + $0xa8] sm:$0xff]
                %254 = vst [vmem:[%s214 + $0x98] sm:$0xff] %v253
                %v255 = vld [vmem:[%s213 + $0xb0] sm:$0xff]
                %256 = vst [vmem:[%s214 + $0xa0] sm:$0xff] %v255
                %v257 = vld [vmem:[%s213 + $0xb8] sm:$0xff]
                %258 = vst [vmem:[%s214 + $0xa8] sm:$0xff] %v257
                %v259 = vld [vmem:[%s213 + $0xc0] sm:$0xff]
                %260 = vst [vmem:[%s214 + $0xb0] sm:$0xff] %v259
                %v261 = vld [vmem:[%s213 + $0xc8] sm:$0xff]
                %262 = vst [vmem:[%s214 + $0xb8] sm:$0xff] %v261
                %v263 = vld [vmem:[%s213 + $0xd0] sm:$0xff]
                %264 = vst [vmem:[%s214 + $0xc0] sm:$0xff] %v263
                %v265 = vld [vmem:[%s213 + $0xd8] sm:$0xff]
                %266 = vst [vmem:[%s214 + $0xc8] sm:$0xff] %v265
                %v267 = vld [vmem:[%s213 + $0xe0] sm:$0xff]
                %268 = vst [vmem:[%s214 + $0xd0] sm:$0xff] %v267
                %v269 = vld [vmem:[%s213 + $0xe8] sm:$0xff]
                %270 = vst [vmem:[%s214 + $0xd8] sm:$0xff] %v269
                %v271 = vld [vmem:[%s213 + $0xf0] sm:$0xff]
                %272 = vst [vmem:[%s214 + $0xe0] sm:$0xff] %v271
                %v273 = vld [vmem:[%s213 + $0xf8] sm:$0xff]
                %274 = vst [vmem:[%s214 + $0xe8] sm:$0xff] %v273
                %v275 = vld [vmem:[%s213 + $0x100] sm:$0xff]
                %276 = vst [vmem:[%s214 + $0xf0] sm:$0xff] %v275
                %v277 = vld [vmem:[%s213 + $0x108] sm:$0xff]
                %278 = vst [vmem:[%s214 + $0xf8] sm:$0xff] %v277
                %v279 = vld [vmem:[%s213 + $0x120] sm:$0xff]
                %280 = vst [vmem:[%s214 + $0x100] sm:$0xff] %v279
                %v281 = vld [vmem:[%s213 + $0x128] sm:$0xff]
                %282 = vst [vmem:[%s214 + $0x108] sm:$0xff] %v281
                %v283 = vld [vmem:[%s213 + $0x130] sm:$0xff]
                %284 = vst [vmem:[%s214 + $0x110] sm:$0xff] %v283
                %v285 = vld [vmem:[%s213 + $0x138] sm:$0xff]
                %286 = vst [vmem:[%s214 + $0x118] sm:$0xff] %v285
                %v287 = vld [vmem:[%s213 + $0x140] sm:$0xff]
                %288 = vst [vmem:[%s214 + $0x120] sm:$0xff] %v287
                %v289 = vld [vmem:[%s213 + $0x148] sm:$0xff]
                %290 = vst [vmem:[%s214 + $0x128] sm:$0xff] %v289
                %v291 = vld [vmem:[%s213 + $0x150] sm:$0xff]
                %292 = vst [vmem:[%s214 + $0x130] sm:$0xff] %v291
                %v293 = vld [vmem:[%s213 + $0x158] sm:$0xff]
                %294 = vst [vmem:[%s214 + $0x138] sm:$0xff] %v293
                %v295 = vld [vmem:[%s213 + $0x160] sm:$0xff]
                %296 = vst [vmem:[%s214 + $0x140] sm:$0xff] %v295
                %v297 = vld [vmem:[%s213 + $0x168] sm:$0xff]
                %298 = vst [vmem:[%s214 + $0x148] sm:$0xff] %v297
                %v299 = vld [vmem:[%s213 + $0x170] sm:$0xff]
                %300 = vst [vmem:[%s214 + $0x150] sm:$0xff] %v299
                %v301 = vld [vmem:[%s213 + $0x178] sm:$0xff]
                %302 = vst [vmem:[%s214 + $0x158] sm:$0xff] %v301
                %v303 = vld [vmem:[%s213 + $0x180] sm:$0xff]
                %304 = vst [vmem:[%s214 + $0x160] sm:$0xff] %v303
                %v305 = vld [vmem:[%s213 + $0x188] sm:$0xff]
                %306 = vst [vmem:[%s214 + $0x168] sm:$0xff] %v305
                %v307 = vld [vmem:[%s213 + $0x190] sm:$0xff]
                %308 = vst [vmem:[%s214 + $0x170] sm:$0xff] %v307
                %v309 = vld [vmem:[%s213 + $0x198] sm:$0xff]
                %310 = vst [vmem:[%s214 + $0x178] sm:$0xff] %v309
                %v311 = vld [vmem:[%s213 + $0x1b0] sm:$0xff]
                %312 = vst [vmem:[%s214 + $0x180] sm:$0xff] %v311
                %v313 = vld [vmem:[%s213 + $0x1b8] sm:$0xff]
                %314 = vst [vmem:[%s214 + $0x188] sm:$0xff] %v313
                %v315 = vld [vmem:[%s213 + $0x1c0] sm:$0xff]
                %316 = vst [vmem:[%s214 + $0x190] sm:$0xff] %v315
                %v317 = vld [vmem:[%s213 + $0x1c8] sm:$0xff]
                %318 = vst [vmem:[%s214 + $0x198] sm:$0xff] %v317
                %v319 = vld [vmem:[%s213 + $0x1d0] sm:$0xff]
                %320 = vst [vmem:[%s214 + $0x1a0] sm:$0xff] %v319
                %v321 = vld [vmem:[%s213 + $0x1d8] sm:$0xff]
                %322 = vst [vmem:[%s214 + $0x1a8] sm:$0xff] %v321
                %v323 = vld [vmem:[%s213 + $0x1e0] sm:$0xff]
                %324 = vst [vmem:[%s214 + $0x1b0] sm:$0xff] %v323
                %v325 = vld [vmem:[%s213 + $0x1e8] sm:$0xff]
                %326 = vst [vmem:[%s214 + $0x1b8] sm:$0xff] %v325
                %v327 = vld [vmem:[%s213 + $0x1f0] sm:$0xff]
                %328 = vst [vmem:[%s214 + $0x1c0] sm:$0xff] %v327
                %v329 = vld [vmem:[%s213 + $0x1f8] sm:$0xff]
                %330 = vst [vmem:[%s214 + $0x1c8] sm:$0xff] %v329
                %v331 = vld [vmem:[%s213 + $0x200] sm:$0xff]
                %332 = vst [vmem:[%s214 + $0x1d0] sm:$0xff] %v331
                %v333 = vld [vmem:[%s213 + $0x208] sm:$0xff]
                %334 = vst [vmem:[%s214 + $0x1d8] sm:$0xff] %v333
                %v335 = vld [vmem:[%s213 + $0x210] sm:$0xff]
                %336 = vst [vmem:[%s214 + $0x1e0] sm:$0xff] %v335
                %v337 = vld [vmem:[%s213 + $0x218] sm:$0xff]
                %338 = vst [vmem:[%s214 + $0x1e8] sm:$0xff] %v337
                %v339 = vld [vmem:[%s213 + $0x220] sm:$0xff]
                %340 = vst [vmem:[%s214 + $0x1f0] sm:$0xff] %v339
                %v341 = vld [vmem:[%s213 + $0x228] sm:$0xff]
                %342 = vst [vmem:[%s214 + $0x1f8] sm:$0xff] %v341
                %s343 = sadd.s32 1, %s212
                %p344 = scmp.ge.s32.totalorder %s343, %s205
                %s345 = scalar_select %p344, 0, %s343
                %s346 = smul.u32 %s345, 128
                %s347 = smul.u32 %s345, 128
                %s348 = scalar_lea.vmem %s195, %s346
                %s349 = scalar_lea.vmem %s183, %s347 [#allocation3]
              $region45: #{tpu_custom_call.1} parent=39 // loop_footer
                %s209 = sadd.s32 %s207, 1
              $region46: #{tpu_custom_call.1} parent=39 // loop_footer_branch
                %206 = sbr.rel target = $region42
              $region47: #{tpu_custom_call.1} parent=39 // loop_exit
                _
              %s350 = sshrl.u32 %s196, 4
              %s351 = sand.u32 %s196, 15
              %s352 = smul.u32 %s350, 16
              %s353 = smul.u32 8, %s352
              %s354 = scalar_lea.vmem %s195, %s353
              %s355 = smul.u32 8, %s352
              %s356 = scalar_lea.vmem %s183, %s355 [#allocation3]
              // While loop
              $region48: #{tpu_custom_call.1} parent=39 // loop_pre_header
                _
              $region49: #{tpu_custom_call.1} parent=39 // loop_header
                %s358 = sphi 0, %s360
                %p359 = scmp.ge.s32.totalorder %s358, %s351
                %s363 = sphi 0, %s376
                %s364 = sphi %s354, %s379
                %s365 = sphi %s356, %s380
              $region50: #{tpu_custom_call.1} parent=39 // loop_header_branch
                %362 = sbr.rel (%p359) target = $region54
              $region51: #{tpu_custom_call.1} parent=39 // loop_body
                %v366 = vld [vmem:[%s364] sm:$0xff]
                %367 = vst [vmem:[%s365] sm:$0xff] %v366
                %v368 = vld [vmem:[%s364 + $0x90] sm:$0xff]
                %369 = vst [vmem:[%s365 + $0x80] sm:$0xff] %v368
                %v370 = vld [vmem:[%s364 + $0x120] sm:$0xff]
                %371 = vst [vmem:[%s365 + $0x100] sm:$0xff] %v370
                %v372 = vld [vmem:[%s364 + $0x1b0] sm:$0xff]
                %373 = vst [vmem:[%s365 + $0x180] sm:$0xff] %v372
                %s374 = sadd.s32 1, %s363
                %p375 = scmp.ge.s32.totalorder %s374, %s351
                %s376 = scalar_select %p375, 0, %s374
                %s377 = smul.u32 %s376, 8
                %s378 = smul.u32 %s376, 8
                %s379 = scalar_lea.vmem %s354, %s377
                %s380 = scalar_lea.vmem %s356, %s378 [#allocation3]
              $region52: #{tpu_custom_call.1} parent=39 // loop_footer
                %s360 = sadd.s32 %s358, 1
              $region53: #{tpu_custom_call.1} parent=39 // loop_footer_branch
                %357 = sbr.rel target = $region49
              $region54: #{tpu_custom_call.1} parent=39 // loop_exit
                _
            $region40: #{tpu_custom_call.1} parent=31 // pred_fallthru
              _
          $region32: #{tpu_custom_call.1} parent=27 // pred_fallthru
            _
          %561 = vnop
        $region28: #{tpu_custom_call.1} parent=23 // pred_fallthru
          _
        // Predicated region
        $region77: #{tpu_custom_call.1} parent=23 // pred_check
          %p562 = pneg %p76
        $region78: #{tpu_custom_call.1} parent=23 // pred_check_branch
          %564 = sbr.rel (%p562) target = $region80
        $region79: #{tpu_custom_call.1} parent=23 // pred_region
          %s565 = sand.u32 %s66, 1
          %s566 = sand.u32 %s66, 1
          %s567 = smul.addr %s566, 32
          %s568 = scalar_lea.vmem [#allocation4], %s567
          %s569 = sadd.s32 %s18, 1
          %s570 = smul.u32 %s569, 8
          %s571 = smul.addr %s570, 2
          %s572 = smul.addr %s17, 72
          %s573 = sadd.s32 %s571, %s572
          %s574 = smul.addr %s573, 8
          %s575 = scalar_lea.vmem %s1, %s574
          // Predicated region
          $region81: #{tpu_custom_call.1} parent=79 // pred_check
            _
          $region82: #{tpu_custom_call.1} parent=79 // pred_check_branch
            %577 = sbr.rel (0) target = $region84
          $region83: #{tpu_custom_call.1} parent=79 // pred_region
            // Predicated region
            $region85: #{tpu_custom_call.1} parent=83 // pred_check
              _
            $region86: #{tpu_custom_call.1} parent=83 // pred_check_branch
              %579 = sbr.rel (0) target = $region88
            $region87: #{tpu_custom_call.1} parent=83 // pred_region
              // Predicated region
              $region100: #{tpu_custom_call.1} parent=87 // pred_check
                _
              $region101: #{tpu_custom_call.1} parent=87 // pred_check_branch
                %600 = sbr.rel (0) target = $region103
              $region102: #{tpu_custom_call.1} parent=87 // pred_region
                loop: start=0, step=1, limit=1
                $region104: #{tpu_custom_call.1} parent=102 // loop_pre_header
                  _
                $region105: #{tpu_custom_call.1} parent=102 // loop_header
                  %s602 = sphi 0, %s606
                  %p603 = scmp.ge.s32.totalorder %s602, 1
                  %s607 = sphi %s575, %s575
                  %s608 = sphi %s568, %s568
                $region106: #{tpu_custom_call.1} parent=102 // loop_header_branch
                  %605 = sbr.rel (%p603) target = $region110
                $region107: #{tpu_custom_call.1} parent=102 // loop_body
                  %v609 = vld [vmem:[%s607] sm:$0xff]
                  %610 = vst [vmem:[%s608] sm:$0xff] %v609
                  %v611 = vld [vmem:[%s607 + $0x8] sm:$0xff]
                  %612 = vst [vmem:[%s608 + $0x8] sm:$0xff] %v611
                  %v613 = vld [vmem:[%s607 + $0x90] sm:$0xff]
                  %614 = vst [vmem:[%s608 + $0x10] sm:$0xff] %v613
                  %v615 = vld [vmem:[%s607 + $0x98] sm:$0xff]
                  %616 = vst [vmem:[%s608 + $0x18] sm:$0xff] %v615
                $region108: #{tpu_custom_call.1} parent=102 // loop_footer
                  %s606 = sadd.s32 1, %s602
                $region109: #{tpu_custom_call.1} parent=102 // loop_footer_branch
                  %601 = sbr.rel target = $region105
                $region110: #{tpu_custom_call.1} parent=102 // loop_exit
                  _
              $region103: #{tpu_custom_call.1} parent=87 // pred_fallthru
                _
              // Predicated region
              $region111: #{tpu_custom_call.1} parent=87 // pred_check
                _
              $region112: #{tpu_custom_call.1} parent=87 // pred_check_branch
                %618 = sbr.rel target = $region114
              $region113: #{tpu_custom_call.1} parent=87 // pred_region
                _
              $region114: #{tpu_custom_call.1} parent=87 // pred_fallthru
                _
            $region88: #{tpu_custom_call.1} parent=83 // pred_fallthru
              _
            // Predicated region
            $region89: #{tpu_custom_call.1} parent=83 // pred_check
              _
            $region90: #{tpu_custom_call.1} parent=83 // pred_check_branch
              %581 = sbr.rel target = $region92
            $region91: #{tpu_custom_call.1} parent=83 // pred_region
              loop: start=0, step=1, limit=1
              $region93: #{tpu_custom_call.1} parent=91 // loop_pre_header
                _
              $region94: #{tpu_custom_call.1} parent=91 // loop_header
                %s584 = sphi 0, %s588
                %p585 = scmp.ge.s32.totalorder %s584, 1
                %s589 = sphi %s575, %s575
                %s590 = sphi %s568, %s568
              $region95: #{tpu_custom_call.1} parent=91 // loop_header_branch
                %587 = sbr.rel (%p585) target = $region99
              $region96: #{tpu_custom_call.1} parent=91 // loop_body
                %v591 = vld [vmem:[%s589] sm:$0xff]
                %592 = vst [vmem:[%s590] sm:$0xff] %v591
                %v593 = vld [vmem:[%s589 + $0x8] sm:$0xff]
                %594 = vst [vmem:[%s590 + $0x8] sm:$0xff] %v593
                %v595 = vld [vmem:[%s589 + $0x90] sm:$0xff]
                %596 = vst [vmem:[%s590 + $0x10] sm:$0xff] %v595
                %v597 = vld [vmem:[%s589 + $0x98] sm:$0xff]
                %598 = vst [vmem:[%s590 + $0x18] sm:$0xff] %v597
              $region97: #{tpu_custom_call.1} parent=91 // loop_footer
                %s588 = sadd.s32 1, %s584
              $region98: #{tpu_custom_call.1} parent=91 // loop_footer_branch
                %583 = sbr.rel target = $region94
              $region99: #{tpu_custom_call.1} parent=91 // loop_exit
                _
            $region92: #{tpu_custom_call.1} parent=83 // pred_fallthru
              _
          $region84: #{tpu_custom_call.1} parent=79 // pred_fallthru
            _
          %619 = vnop
        $region80: #{tpu_custom_call.1} parent=23 // pred_fallthru
          _
      $region24: #{tpu_custom_call.1} parent=5 // pred_fallthru
        _
      %p620 = scmp.le.s32.totalorder 1, %s10
      %p621 = scmp.lt.s32.totalorder %s10, 3
      %p622 = pnand %p620, %p621
      %p623 = pneg %p622
      // Predicated region
      $region115: #{tpu_custom_call.1} parent=5 // pred_check
        _
      $region116: #{tpu_custom_call.1} parent=5 // pred_check_branch
        %625 = sbr.rel (%p622) target = $region118
      $region117: #{tpu_custom_call.1} parent=5 // pred_region
        %s626 = ssub.s32 %s10, 1
        %s627 = sand.u32 %s37, 1
        %s628 = sand.u32 %s37, 1
        %s629 = smul.addr %s628, 512
        %s630 = scalar_lea.vmem [#allocation3], %s629
        // Predicated region
        $region119: #{tpu_custom_call.1} parent=117 // pred_check
          %p631 = pneg %p50
        $region120: #{tpu_custom_call.1} parent=117 // pred_check_branch
          %633 = sbr.rel (%p631) target = $region122
        $region121: #{tpu_custom_call.1} parent=117 // pred_region
          _
        $region122: #{tpu_custom_call.1} parent=117 // pred_fallthru
          _
        %s634 = sand.u32 %s69, 1
        %s635 = sand.u32 %s69, 1
        %s636 = smul.addr %s635, 32
        %s637 = scalar_lea.vmem [#allocation4], %s636
        // Predicated region
        $region123: #{tpu_custom_call.1} parent=117 // pred_check
          %p638 = pneg %p82
        $region124: #{tpu_custom_call.1} parent=117 // pred_check_branch
          %640 = sbr.rel (%p638) target = $region126
        $region125: #{tpu_custom_call.1} parent=117 // pred_region
          _
        $region126: #{tpu_custom_call.1} parent=117 // pred_fallthru
          _
        %s641 = sand.u32 %s37, 1
        %s642 = sand.u32 %s37, 1
        %s643 = smul.addr %s642, 512
        %s644 = scalar_lea.vmem [#allocation3], %s643
        %p645 = pneg %p50
        %p646 = pneg %p47
        %s647 = sand.u32 %s69, 1
        %s648 = sand.u32 %s69, 1
        %s649 = smul.addr %s648, 32
        %s650 = scalar_lea.vmem [#allocation4], %s649
        %p651 = pneg %p82
        %p652 = pneg %p79
        %p653 = pneg %p103
        %p654 = pneg %p100
        %p655 = pneg %p124
        %p656 = pneg %p121
        %p657 = pneg %p152
        %p658 = pneg %p149
        %s659 = smul.u32 8, %s20
        %p660 = scmp.lt.s32.totalorder %s19, 1
        %s661 = scalar_select %p660, %s19, 1
        %p662 = scmp.lt.s32.totalorder %s659, 7
        %s663 = scalar_select %p662, %s659, 7
        %s664 = smul.addr %s661, 8
        %s665 = sadd.s32 %s663, %s664
        %s666 = smul.addr %s665, 8
        %s667 = scalar_lea.vmem %s4, %s666
        %s668 = smul.u32 8, %s20
        %s669 = ssub.s32 9, %s668
        %p670 = scmp.lt.s32.totalorder %s669, 8
        %s671 = scalar_select %p670, %s669, 8
        %s672 = smul.u32 512, %s671
        %s673 = smul.u32 %s672, 2
        %s674 = sadd.s32 %s20, 1
        %s675 = smul.u32 %s674, 8
        %s676 = smul.u32 8, %s20
        %p677 = scmp.lt.s32.totalorder %s19, 1
        %s678 = scalar_select %p677, %s19, 1
        %p679 = scmp.lt.s32.totalorder %s676, 7
        %s680 = scalar_select %p679, %s676, 7
        %s681 = smul.addr %s678, 8
        %s682 = sadd.s32 %s680, %s681
        %s683 = smul.addr %s682, 8
        %s684 = scalar_lea.vmem %s4, %s683
        %s685 = smul.u32 8, %s20
        %v686 = vld [vmem:[%s630] sm:$0xff]
        %v687 = vld [vmem:[%s630 + $0x8] sm:$0x1]
        %v688 = vld [vmem:[%s630 + $0x10] sm:$0xff]
        %v689 = vld [vmem:[%s630 + $0x18] sm:$0x1]
        %v690 = vld [vmem:[%s630 + $0x20] sm:$0xff]
        %v691 = vld [vmem:[%s630 + $0x28] sm:$0x1]
        %v692 = vld [vmem:[%s630 + $0x30] sm:$0xff]
        %v693 = vld [vmem:[%s630 + $0x38] sm:$0x1]
        %v694 = vld [vmem:[%s630 + $0x40] sm:$0xff]
        %v695 = vld [vmem:[%s630 + $0x48] sm:$0x1]
        %v696 = vld [vmem:[%s630 + $0x50] sm:$0xff]
        %v697 = vld [vmem:[%s630 + $0x58] sm:$0x1]
        %v698 = vld [vmem:[%s630 + $0x60] sm:$0xff]
        %v699 = vld [vmem:[%s630 + $0x68] sm:$0x1]
        %v700 = vld [vmem:[%s630 + $0x70] sm:$0xff]
        %v701 = vld [vmem:[%s630 + $0x78] sm:$0x1]
        %s702 = scalar_lea.vmem %s630, 128 [#allocation3]
        %v703 = vld [vmem:[%s702] sm:$0xff]
        %v704 = vld [vmem:[%s702 + $0x10] sm:$0xff]
        %v705 = vld [vmem:[%s702 + $0x20] sm:$0xff]
        %v706 = vld [vmem:[%s702 + $0x30] sm:$0xff]
        %v707 = vld [vmem:[%s702 + $0x40] sm:$0xff]
        %v708 = vld [vmem:[%s702 + $0x50] sm:$0xff]
        %v709 = vld [vmem:[%s702 + $0x60] sm:$0xff]
        %v710 = vld [vmem:[%s702 + $0x70] sm:$0xff]
        %s711 = scalar_lea.vmem %s630, 256 [#allocation3]
        %v712 = vld [vmem:[%s711] sm:$0xff]
        %v713 = vld [vmem:[%s711 + $0x8] sm:$0x1]
        %v714 = vld [vmem:[%s711 + $0x10] sm:$0xff]
        %v715 = vld [vmem:[%s711 + $0x18] sm:$0x1]
        %v716 = vld [vmem:[%s711 + $0x20] sm:$0xff]
        %v717 = vld [vmem:[%s711 + $0x28] sm:$0x1]
        %v718 = vld [vmem:[%s711 + $0x30] sm:$0xff]
        %v719 = vld [vmem:[%s711 + $0x38] sm:$0x1]
        %v720 = vld [vmem:[%s711 + $0x40] sm:$0xff]
        %v721 = vld [vmem:[%s711 + $0x48] sm:$0x1]
        %v722 = vld [vmem:[%s711 + $0x50] sm:$0xff]
        %v723 = vld [vmem:[%s711 + $0x58] sm:$0x1]
        %v724 = vld [vmem:[%s711 + $0x60] sm:$0xff]
        %v725 = vld [vmem:[%s711 + $0x68] sm:$0x1]
        %v726 = vld [vmem:[%s711 + $0x70] sm:$0xff]
        %v727 = vld [vmem:[%s711 + $0x78] sm:$0x1]
        %s728 = scalar_lea.vmem %s630, 384 [#allocation3]
        %v729 = vld [vmem:[%s728] sm:$0xff]
        %v730 = vld [vmem:[%s728 + $0x10] sm:$0xff]
        %v731 = vld [vmem:[%s728 + $0x20] sm:$0xff]
        %v732 = vld [vmem:[%s728 + $0x30] sm:$0xff]
        %v733 = vld [vmem:[%s728 + $0x40] sm:$0xff]
        %v734 = vld [vmem:[%s728 + $0x50] sm:$0xff]
        %v735 = vld [vmem:[%s728 + $0x60] sm:$0xff]
        %v736 = vld [vmem:[%s728 + $0x70] sm:$0xff]
        %v737 = vld [vmem:[%s637] sm:$0xff]
        %v738 = vld [vmem:[%s637 + $0x8] sm:$0x1]
        %s739 = scalar_lea.vmem %s637, 16 [#allocation4]
        %v740 = vld [vmem:[%s739] sm:$0xff]
        %v741 = vld [vmem:[%s2] sm:$0xf]
        %vm742 = vcmask 31744
        %v744 = vsel %vm742, %v686, 0
        %v747 = vsel %vm742, %v688, 0
        %v750 = vsel %vm742, %v690, 0
        %v753 = vsel %vm742, %v692, 0
        %v756 = vsel %vm742, %v694, 0
        %v759 = vsel %vm742, %v696, 0
        %v762 = vsel %vm742, %v698, 0
        %v765 = vsel %vm742, %v700, 0
        %vm767 = vcmask 1043456
        %v769 = vsel %vm767, %v741, 0
        %771 = vmatprep.subr.mxu0 0.0
        %772 = vmatpush1.msra.mxu0 %v769
        %773 = vmatprep.subr.mxu0 0.0
        %774 = vmatpush1.msra.mxu0 0.0
        %775 = vmatprep.subr.mxu0 0.0
        %776 = vmatpush1.msra.mxu0 0.0
        %777 = vmatprep.subr.mxu0 0.0
        %778 = vmatpush1.msra.mxu0 0.0
        %779 = vmatprep.subr.mxu0 0.0
        %780 = vmatpush1.msra.mxu0 0.0
        %781 = vmatprep.subr.mxu0 0.0
        %782 = vmatpush1.msra.mxu0 0.0
        %783 = vmatprep.subr.mxu0 0.0
        %784 = vmatpush1.msra.mxu0 0.0
        %785 = vmatprep.subr.mxu0 0.0
        %786 = vmatpush1.msra.mxu0 0.0
        %787 = vmatprep.subr.mxu0 0.0
        %788 = vmatpush1.msra.mxu0 0.0
        %789 = vmatprep.subr.mxu0 0.0
        %790 = vmatpush1.msra.mxu0 0.0
        %791 = vmatprep.subr.mxu0 0.0
        %792 = vmatpush1.msra.mxu0 0.0
        %793 = vmatprep.subr.mxu0 0.0
        %794 = vmatpush1.msra.mxu0 0.0
        %795 = vmatprep.subr.mxu0 0.0
        %796 = vmatpush1.msra.mxu0 0.0
        %797 = vmatprep.subr.mxu0 0.0
        %798 = vmatpush1.msra.mxu0 0.0
        %799 = vmatprep.subr.mxu0 0.0
        %800 = vmatpush1.msra.mxu0 0.0
        %801 = vmatprep.subr.mxu0 0.0
        %802 = vmatpush1.msra.mxu0 0.0
        %803 = vmatprep.subr.mxu0 0.0
        %804 = vmatpush1.msra.mxu0 0.0
        %805 = vmatprep.subr.mxu0 0.0
        %806 = vmatpush1.msra.mxu0 0.0
        %807 = vmatprep.subr.mxu0 0.0
        %808 = vmatpush1.msra.mxu0 0.0
        %809 = vmatprep.subr.mxu0 0.0
        %810 = vmatpush1.msra.mxu0 0.0
        %811 = vmatprep.subr.mxu0 0.0
        %812 = vmatpush1.msra.mxu0 0.0
        %813 = vmatprep.subr.mxu0 0.0
        %814 = vmatpush1.msra.mxu0 0.0
        %815 = vmatprep.subr.mxu0 0.0
        %816 = vmatpush1.msra.mxu0 0.0
        %817 = vmatprep.subr.mxu0 0.0
        %818 = vmatpush1.msra.mxu0 0.0
        %819 = vmatprep.subr.mxu0 0.0
        %820 = vmatpush1.msra.mxu0 0.0
        %821 = vmatprep.subr.mxu0 0.0
        %822 = vmatpush1.msra.mxu0 0.0
        %823 = vmatprep.subr.mxu0 0.0
        %824 = vmatpush1.msra.mxu0 0.0
        %825 = vmatprep.subr.mxu0 0.0
        %826 = vmatpush1.msra.mxu0 0.0
        %827 = vmatprep.subr.mxu0 0.0
        %828 = vmatpush1.msra.mxu0 0.0
        %829 = vmatprep.subr.mxu0 0.0
        %830 = vmatpush1.msra.mxu0 0.0
        %831 = vmatprep.subr.mxu0 0.0
        %832 = vmatpush1.msra.mxu0 0.0
        %833 = vmatprep.subr.mxu0 0.0
        %834 = vmatpush1.msra.mxu0 0.0
        %835 = vmatprep.mubr.f32.mxu0 0.0
        %836 = vmatmul.mubr.f32.gmra.mrb[0].mxu0 %v744
        %v837 = vpop.f32.mrb[0].mxu0
        %v838 = vadd.f32 0.0, %v837
        %v839 = vpop.f32.mrb[0].mxu0
        %840 = vmatprep.mubr.f32.mxu0 0.0
        %841 = vmatmul.mubr.f32.gmra.mrb[0].mxu0 %v747
        %v842 = vpop.f32.mrb[0].mxu0
        %v843 = vadd.f32 0.0, %v842
        %v844 = vpop.f32.mrb[0].mxu0
        %845 = vmatprep.mubr.f32.mxu0 0.0
        %846 = vmatmul.mubr.f32.gmra.mrb[0].mxu0 %v750
        %v847 = vpop.f32.mrb[0].mxu0
        %v848 = vadd.f32 0.0, %v847
        %v849 = vpop.f32.mrb[0].mxu0
        %850 = vmatprep.mubr.f32.mxu0 0.0
        %851 = vmatmul.mubr.f32.gmra.mrb[0].mxu0 %v753
        %v852 = vpop.f32.mrb[0].mxu0
        %v853 = vadd.f32 0.0, %v852
        %v854 = vpop.f32.mrb[0].mxu0
        %855 = vmatprep.mubr.f32.mxu0 0.0
        %856 = vmatmul.mubr.f32.gmra.mrb[0].mxu0 %v756
        %v857 = vpop.f32.mrb[0].mxu0
        %v858 = vadd.f32 0.0, %v857
        %v859 = vpop.f32.mrb[0].mxu0
        %860 = vmatprep.mubr.f32.mxu0 0.0
        %861 = vmatmul.mubr.f32.gmra.mrb[0].mxu0 %v759
        %v862 = vpop.f32.mrb[0].mxu0
        %v863 = vadd.f32 0.0, %v862
        %v864 = vpop.f32.mrb[0].mxu0
        %865 = vmatprep.mubr.f32.mxu0 0.0
        %866 = vmatmul.mubr.f32.gmra.mrb[0].mxu0 %v762
        %v867 = vpop.f32.mrb[0].mxu0
        %v868 = vadd.f32 0.0, %v867
        %v869 = vpop.f32.mrb[0].mxu0
        %870 = vmatprep.mubr.f32.mxu0 0.0
        %871 = vmatmul.mubr.f32.gmra.mrb[0].mxu0 %v765
        %v872 = vpop.f32.mrb[0].mxu0
        %v873 = vadd.f32 0.0, %v872
        %v874 = vpop.f32.mrb[0].mxu0
        %875 = vdwg.mxu0
        %876 = vst.msk [vmem:[#allocation2] sm:$0xff] %vm742, %v838
        %877 = vst.msk [vmem:[#allocation2 + $0x8] sm:$0xff] %vm742, %v843
        %878 = vst.msk [vmem:[#allocation2 + $0x10] sm:$0xff] %vm742, %v848
        %879 = vst.msk [vmem:[#allocation2 + $0x18] sm:$0xff] %vm742, %v853
        %880 = vst.msk [vmem:[#allocation2 + $0x20] sm:$0xff] %vm742, %v858
        %881 = vst.msk [vmem:[#allocation2 + $0x28] sm:$0xff] %vm742, %v863
        %882 = vst.msk [vmem:[#allocation2 + $0x30] sm:$0xff] %vm742, %v868
        %883 = vst.msk [vmem:[#allocation2 + $0x38] sm:$0xff] %vm742, %v873
        %s884 = scalar_lea.vmem %s2, 4
        %v885 = vld [vmem:[%s884] sm:$0xf]
        %v887 = vsel %vm742, %v703, 0
        %v890 = vsel %vm742, %v704, 0
        %v893 = vsel %vm742, %v705, 0
        %v896 = vsel %vm742, %v706, 0
        %v899 = vsel %vm742, %v707, 0
        %v902 = vsel %vm742, %v708, 0
        %v905 = vsel %vm742, %v709, 0
        %v908 = vsel %vm742, %v710, 0
        %v911 = vsel %vm767, %v885, 0
        %913 = vmatprep.subr.mxu0 0.0
        %914 = vmatpush1.msra.mxu0 %v911
        %915 = vmatprep.subr.mxu0 0.0
        %916 = vmatpush1.msra.mxu0 0.0
        %917 = vmatprep.subr.mxu0 0.0
        %918 = vmatpush1.msra.mxu0 0.0
        %919 = vmatprep.subr.mxu0 0.0
        %920 = vmatpush1.msra.mxu0 0.0
        %921 = vmatprep.subr.mxu0 0.0
        %922 = vmatpush1.msra.mxu0 0.0
        %923 = vmatprep.subr.mxu0 0.0
        %924 = vmatpush1.msra.mxu0 0.0
        %925 = vmatprep.subr.mxu0 0.0
        %926 = vmatpush1.msra.mxu0 0.0
        %927 = vmatprep.subr.mxu0 0.0
        %928 = vmatpush1.msra.mxu0 0.0
        %929 = vmatprep.subr.mxu0 0.0
        %930 = vmatpush1.msra.mxu0 0.0
        %931 = vmatprep.subr.mxu0 0.0
        %932 = vmatpush1.msra.mxu0 0.0
        %933 = vmatprep.subr.mxu0 0.0
        %934 = vmatpush1.msra.mxu0 0.0
        %935 = vmatprep.subr.mxu0 0.0
        %936 = vmatpush1.msra.mxu0 0.0
        %937 = vmatprep.subr.mxu0 0.0
        %938 = vmatpush1.msra.mxu0 0.0
        %939 = vmatprep.subr.mxu0 0.0
        %940 = vmatpush1.msra.mxu0 0.0
        %941 = vmatprep.subr.mxu0 0.0
        %942 = vmatpush1.msra.mxu0 0.0
        %943 = vmatprep.subr.mxu0 0.0
        %944 = vmatpush1.msra.mxu0 0.0
        %945 = vmatprep.subr.mxu0 0.0
        %946 = vmatpush1.msra.mxu0 0.0
        %947 = vmatprep.subr.mxu0 0.0
        %948 = vmatpush1.msra.mxu0 0.0
        %949 = vmatprep.subr.mxu0 0.0
        %950 = vmatpush1.msra.mxu0 0.0
        %951 = vmatprep.subr.mxu0 0.0
        %952 = vmatpush1.msra.mxu0 0.0
        %953 = vmatprep.subr.mxu0 0.0
        %954 = vmatpush1.msra.mxu0 0.0
        %955 = vmatprep.subr.mxu0 0.0
        %956 = vmatpush1.msra.mxu0 0.0
        %957 = vmatprep.subr.mxu0 0.0
        %958 = vmatpush1.msra.mxu0 0.0
        %959 = vmatprep.subr.mxu0 0.0
        %960 = vmatpush1.msra.mxu0 0.0
        %961 = vmatprep.subr.mxu0 0.0
        %962 = vmatpush1.msra.mxu0 0.0
        %963 = vmatprep.subr.mxu0 0.0
        %964 = vmatpush1.msra.mxu0 0.0
        %965 = vmatprep.subr.mxu0 0.0
        %966 = vmatpush1.msra.mxu0 0.0
        %967 = vmatprep.subr.mxu0 0.0
        %968 = vmatpush1.msra.mxu0 0.0
        %969 = vmatprep.subr.mxu0 0.0
        %970 = vmatpush1.msra.mxu0 0.0
        %971 = vmatprep.subr.mxu0 0.0
        %972 = vmatpush1.msra.mxu0 0.0
        %973 = vmatprep.subr.mxu0 0.0
        %974 = vmatpush1.msra.mxu0 0.0
        %975 = vmatprep.subr.mxu0 0.0
        %976 = vmatpush1.msra.mxu0 0.0
        %977 = vmatprep.mubr.f32.mxu0 0.0
        %978 = vmatmul.mubr.f32.gmra.mrb[0].mxu0 %v887
        %v979 = vpop.f32.mrb[0].mxu0
        %v980 = vadd.f32 0.0, %v979
        %v981 = vpop.f32.mrb[0].mxu0
        %982 = vmatprep.mubr.f32.mxu0 0.0
        %983 = vmatmul.mubr.f32.gmra.mrb[0].mxu0 %v890
        %v984 = vpop.f32.mrb[0].mxu0
        %v985 = vadd.f32 0.0, %v984
        %v986 = vpop.f32.mrb[0].mxu0
        %987 = vmatprep.mubr.f32.mxu0 0.0
        %988 = vmatmul.mubr.f32.gmra.mrb[0].mxu0 %v893
        %v989 = vpop.f32.mrb[0].mxu0
        %v990 = vadd.f32 0.0, %v989
        %v991 = vpop.f32.mrb[0].mxu0
        %992 = vmatprep.mubr.f32.mxu0 0.0
        %993 = vmatmul.mubr.f32.gmra.mrb[0].mxu0 %v896
        %v994 = vpop.f32.mrb[0].mxu0
        %v995 = vadd.f32 0.0, %v994
        %v996 = vpop.f32.mrb[0].mxu0
        %997 = vmatprep.mubr.f32.mxu0 0.0
        %998 = vmatmul.mubr.f32.gmra.mrb[0].mxu0 %v899
        %v999 = vpop.f32.mrb[0].mxu0
        %v1000 = vadd.f32 0.0, %v999
        %v1001 = vpop.f32.mrb[0].mxu0
        %1002 = vmatprep.mubr.f32.mxu0 0.0
        %1003 = vmatmul.mubr.f32.gmra.mrb[0].mxu0 %v902
        %v1004 = vpop.f32.mrb[0].mxu0
        %v1005 = vadd.f32 0.0, %v1004
        %v1006 = vpop.f32.mrb[0].mxu0
        %1007 = vmatprep.mubr.f32.mxu0 0.0
        %1008 = vmatmul.mubr.f32.gmra.mrb[0].mxu0 %v905
        %v1009 = vpop.f32.mrb[0].mxu0
        %v1010 = vadd.f32 0.0, %v1009
        %v1011 = vpop.f32.mrb[0].mxu0
        %1012 = vmatprep.mubr.f32.mxu0 0.0
        %1013 = vmatmul.mubr.f32.gmra.mrb[0].mxu0 %v908
        %v1014 = vpop.f32.mrb[0].mxu0
        %v1015 = vadd.f32 0.0, %v1014
        %v1016 = vpop.f32.mrb[0].mxu0
        %1017 = vdwg.mxu0
        %v1018 = vld [vmem:[#allocation2] sm:$0xff]
        %v1019 = vld [vmem:[#allocation2 + $0x8] sm:$0xff]
        %v1020 = vld [vmem:[#allocation2 + $0x10] sm:$0xff]
        %v1021 = vld [vmem:[#allocation2 + $0x18] sm:$0xff]
        %v1022 = vld [vmem:[#allocation2 + $0x20] sm:$0xff]
        %v1023 = vld [vmem:[#allocation2 + $0x28] sm:$0xff]
        %v1024 = vld [vmem:[#allocation2 + $0x30] sm:$0xff]
        %v1025 = vld [vmem:[#allocation2 + $0x38] sm:$0xff]
        %v1026 = vadd.f32 %v1018, %v980
        %v1027 = vadd.f32 %v1019, %v985
        %v1028 = vadd.f32 %v1020, %v990
        %v1029 = vadd.f32 %v1021, %v995
        %v1030 = vadd.f32 %v1022, %v1000
        %v1031 = vadd.f32 %v1023, %v1005
        %v1032 = vadd.f32 %v1024, %v1010
        %v1033 = vadd.f32 %v1025, %v1015
        %1034 = vst.msk [vmem:[#allocation2] sm:$0xff] %vm742, %v1026
        %1035 = vst.msk [vmem:[#allocation2 + $0x8] sm:$0xff] %vm742, %v1027
        %1036 = vst.msk [vmem:[#allocation2 + $0x10] sm:$0xff] %vm742, %v1028
        %1037 = vst.msk [vmem:[#allocation2 + $0x18] sm:$0xff] %vm742, %v1029
        %1038 = vst.msk [vmem:[#allocation2 + $0x20] sm:$0xff] %vm742, %v1030
        %1039 = vst.msk [vmem:[#allocation2 + $0x28] sm:$0xff] %vm742, %v1031
        %1040 = vst.msk [vmem:[#allocation2 + $0x30] sm:$0xff] %vm742, %v1032
        %1041 = vst.msk [vmem:[#allocation2 + $0x38] sm:$0xff] %vm742, %v1033
        %vm1050 = vcmask 1046528
        %v1051 = vrot.slane %v686, 1
        %v1052 = vrot.slane %v687, 1
        %v1053 = vsel %vm1050, %v1051, %v1052
        %v1054 = vrot.slane %v688, 1
        %v1055 = vrot.slane %v689, 1
        %v1056 = vsel %vm1050, %v1054, %v1055
        %v1057 = vrot.slane %v690, 1
        %v1058 = vrot.slane %v691, 1
        %v1059 = vsel %vm1050, %v1057, %v1058
        %v1060 = vrot.slane %v692, 1
        %v1061 = vrot.slane %v693, 1
        %v1062 = vsel %vm1050, %v1060, %v1061
        %v1063 = vrot.slane %v694, 1
        %v1064 = vrot.slane %v695, 1
        %v1065 = vsel %vm1050, %v1063, %v1064
        %v1066 = vrot.slane %v696, 1
        %v1067 = vrot.slane %v697, 1
        %v1068 = vsel %vm1050, %v1066, %v1067
        %v1069 = vrot.slane %v698, 1
        %v1070 = vrot.slane %v699, 1
        %v1071 = vsel %vm1050, %v1069, %v1070
        %v1072 = vrot.slane %v700, 1
        %v1073 = vrot.slane %v701, 1
        %v1074 = vsel %vm1050, %v1072, %v1073
        %s1075 = scalar_lea.vmem %s2, 8
        %v1076 = vld [vmem:[%s1075] sm:$0xf]
        %v1077 = vsel %vm742, %v1053, 0
        %v1079 = vsel %vm742, %v1056, 0
        %v1081 = vsel %vm742, %v1059, 0
        %v1083 = vsel %vm742, %v1062, 0
        %v1085 = vsel %vm742, %v1065, 0
        %v1087 = vsel %vm742, %v1068, 0
        %v1089 = vsel %vm742, %v1071, 0
        %v1091 = vsel %vm742, %v1074, 0
        %v1094 = vsel %vm767, %v1076, 0
        %1096 = vmatprep.subr.mxu0 0.0
        %1097 = vmatpush1.msra.mxu0 %v1094
        %1098 = vmatprep.subr.mxu0 0.0
        %1099 = vmatpush1.msra.mxu0 0.0
        %1100 = vmatprep.subr.mxu0 0.0
        %1101 = vmatpush1.msra.mxu0 0.0
        %1102 = vmatprep.subr.mxu0 0.0
        %1103 = vmatpush1.msra.mxu0 0.0
        %1104 = vmatprep.subr.mxu0 0.0
        %1105 = vmatpush1.msra.mxu0 0.0
        %1106 = vmatprep.subr.mxu0 0.0
        %1107 = vmatpush1.msra.mxu0 0.0
        %1108 = vmatprep.subr.mxu0 0.0
        %1109 = vmatpush1.msra.mxu0 0.0
        %1110 = vmatprep.subr.mxu0 0.0
        %1111 = vmatpush1.msra.mxu0 0.0
        %1112 = vmatprep.subr.mxu0 0.0
        %1113 = vmatpush1.msra.mxu0 0.0
        %1114 = vmatprep.subr.mxu0 0.0
        %1115 = vmatpush1.msra.mxu0 0.0
        %1116 = vmatprep.subr.mxu0 0.0
        %1117 = vmatpush1.msra.mxu0 0.0
        %1118 = vmatprep.subr.mxu0 0.0
        %1119 = vmatpush1.msra.mxu0 0.0
        %1120 = vmatprep.subr.mxu0 0.0
        %1121 = vmatpush1.msra.mxu0 0.0
        %1122 = vmatprep.subr.mxu0 0.0
        %1123 = vmatpush1.msra.mxu0 0.0
        %1124 = vmatprep.subr.mxu0 0.0
        %1125 = vmatpush1.msra.mxu0 0.0
        %1126 = vmatprep.subr.mxu0 0.0
        %1127 = vmatpush1.msra.mxu0 0.0
        %1128 = vmatprep.subr.mxu0 0.0
        %1129 = vmatpush1.msra.mxu0 0.0
        %1130 = vmatprep.subr.mxu0 0.0
        %1131 = vmatpush1.msra.mxu0 0.0
        %1132 = vmatprep.subr.mxu0 0.0
        %1133 = vmatpush1.msra.mxu0 0.0
        %1134 = vmatprep.subr.mxu0 0.0
        %1135 = vmatpush1.msra.mxu0 0.0
        %1136 = vmatprep.subr.mxu0 0.0
        %1137 = vmatpush1.msra.mxu0 0.0
        %1138 = vmatprep.subr.mxu0 0.0
        %1139 = vmatpush1.msra.mxu0 0.0
        %1140 = vmatprep.subr.mxu0 0.0
        %1141 = vmatpush1.msra.mxu0 0.0
        %1142 = vmatprep.subr.mxu0 0.0
        %1143 = vmatpush1.msra.mxu0 0.0
        %1144 = vmatprep.subr.mxu0 0.0
        %1145 = vmatpush1.msra.mxu0 0.0
        %1146 = vmatprep.subr.mxu0 0.0
        %1147 = vmatpush1.msra.mxu0 0.0
        %1148 = vmatprep.subr.mxu0 0.0
        %1149 = vmatpush1.msra.mxu0 0.0
        %1150 = vmatprep.subr.mxu0 0.0
        %1151 = vmatpush1.msra.mxu0 0.0
        %1152 = vmatprep.subr.mxu0 0.0
        %1153 = vmatpush1.msra.mxu0 0.0
        %1154 = vmatprep.subr.mxu0 0.0
        %1155 = vmatpush1.msra.mxu0 0.0
        %1156 = vmatprep.subr.mxu0 0.0
        %1157 = vmatpush1.msra.mxu0 0.0
        %1158 = vmatprep.subr.mxu0 0.0
        %1159 = vmatpush1.msra.mxu0 0.0
        %1160 = vmatprep.mubr.f32.mxu0 0.0
        %1161 = vmatmul.mubr.f32.gmra.mrb[0].mxu0 %v1077
        %v1162 = vpop.f32.mrb[0].mxu0
        %v1163 = vadd.f32 0.0, %v1162
        %v1164 = vpop.f32.mrb[0].mxu0
        %1165 = vmatprep.mubr.f32.mxu0 0.0
        %1166 = vmatmul.mubr.f32.gmra.mrb[0].mxu0 %v1079
        %v1167 = vpop.f32.mrb[0].mxu0
        %v1168 = vadd.f32 0.0, %v1167
        %v1169 = vpop.f32.mrb[0].mxu0
        %1170 = vmatprep.mubr.f32.mxu0 0.0
        %1171 = vmatmul.mubr.f32.gmra.mrb[0].mxu0 %v1081
        %v1172 = vpop.f32.mrb[0].mxu0
        %v1173 = vadd.f32 0.0, %v1172
        %v1174 = vpop.f32.mrb[0].mxu0
        %1175 = vmatprep.mubr.f32.mxu0 0.0
        %1176 = vmatmul.mubr.f32.gmra.mrb[0].mxu0 %v1083
        %v1177 = vpop.f32.mrb[0].mxu0
        %v1178 = vadd.f32 0.0, %v1177
        %v1179 = vpop.f32.mrb[0].mxu0
        %1180 = vmatprep.mubr.f32.mxu0 0.0
        %1181 = vmatmul.mubr.f32.gmra.mrb[0].mxu0 %v1085
        %v1182 = vpop.f32.mrb[0].mxu0
        %v1183 = vadd.f32 0.0, %v1182
        %v1184 = vpop.f32.mrb[0].mxu0
        %1185 = vmatprep.mubr.f32.mxu0 0.0
        %1186 = vmatmul.mubr.f32.gmra.mrb[0].mxu0 %v1087
        %v1187 = vpop.f32.mrb[0].mxu0
        %v1188 = vadd.f32 0.0, %v1187
        %v1189 = vpop.f32.mrb[0].mxu0
        %1190 = vmatprep.mubr.f32.mxu0 0.0
        %1191 = vmatmul.mubr.f32.gmra.mrb[0].mxu0 %v1089
        %v1192 = vpop.f32.mrb[0].mxu0
        %v1193 = vadd.f32 0.0, %v1192
        %v1194 = vpop.f32.mrb[0].mxu0
        %1195 = vmatprep.mubr.f32.mxu0 0.0
        %1196 = vmatmul.mubr.f32.gmra.mrb[0].mxu0 %v1091
        %v1197 = vpop.f32.mrb[0].mxu0
        %v1198 = vadd.f32 0.0, %v1197
        %v1199 = vpop.f32.mrb[0].mxu0
        %1200 = vdwg.mxu0
        %v1201 = vld [vmem:[#allocation2] sm:$0xff]
        %v1202 = vld [vmem:[#allocation2 + $0x8] sm:$0xff]
        %v1203 = vld [vmem:[#allocation2 + $0x10] sm:$0xff]
        %v1204 = vld [vmem:[#allocation2 + $0x18] sm:$0xff]
        %v1205 = vld [vmem:[#allocation2 + $0x20] sm:$0xff]
        %v1206 = vld [vmem:[#allocation2 + $0x28] sm:$0xff]
        %v1207 = vld [vmem:[#allocation2 + $0x30] sm:$0xff]
        %v1208 = vld [vmem:[#allocation2 + $0x38] sm:$0xff]
        %v1209 = vadd.f32 %v1201, %v1163
        %v1210 = vadd.f32 %v1202, %v1168
        %v1211 = vadd.f32 %v1203, %v1173
        %v1212 = vadd.f32 %v1204, %v1178
        %v1213 = vadd.f32 %v1205, %v1183
        %v1214 = vadd.f32 %v1206, %v1188
        %v1215 = vadd.f32 %v1207, %v1193
        %v1216 = vadd.f32 %v1208, %v1198
        %1217 = vst.msk [vmem:[#allocation2] sm:$0xff] %vm742, %v1209
        %1218 = vst.msk [vmem:[#allocation2 + $0x8] sm:$0xff] %vm742, %v1210
        %1219 = vst.msk [vmem:[#allocation2 + $0x10] sm:$0xff] %vm742, %v1211
        %1220 = vst.msk [vmem:[#allocation2 + $0x18] sm:$0xff] %vm742, %v1212
        %1221 = vst.msk [vmem:[#allocation2 + $0x20] sm:$0xff] %vm742, %v1213
        %1222 = vst.msk [vmem:[#allocation2 + $0x28] sm:$0xff] %vm742, %v1214
        %1223 = vst.msk [vmem:[#allocation2 + $0x30] sm:$0xff] %vm742, %v1215
        %1224 = vst.msk [vmem:[#allocation2 + $0x38] sm:$0xff] %vm742, %v1216
        %s1225 = scalar_lea.vmem %s2, 12
        %v1226 = vld [vmem:[%s1225] sm:$0xf]
        %v1228 = vsel %vm742, %v712, 0
        %v1231 = vsel %vm742, %v714, 0
        %v1234 = vsel %vm742, %v716, 0
        %v1237 = vsel %vm742, %v718, 0
        %v1240 = vsel %vm742, %v720, 0
        %v1243 = vsel %vm742, %v722, 0
        %v1246 = vsel %vm742, %v724, 0
        %v1249 = vsel %vm742, %v726, 0
        %v1252 = vsel %vm767, %v1226, 0
        %1254 = vmatprep.subr.mxu0 0.0
        %1255 = vmatpush1.msra.mxu0 %v1252
        %1256 = vmatprep.subr.mxu0 0.0
        %1257 = vmatpush1.msra.mxu0 0.0
        %1258 = vmatprep.subr.mxu0 0.0
        %1259 = vmatpush1.msra.mxu0 0.0
        %1260 = vmatprep.subr.mxu0 0.0
        %1261 = vmatpush1.msra.mxu0 0.0
        %1262 = vmatprep.subr.mxu0 0.0
        %1263 = vmatpush1.msra.mxu0 0.0
        %1264 = vmatprep.subr.mxu0 0.0
        %1265 = vmatpush1.msra.mxu0 0.0
        %1266 = vmatprep.subr.mxu0 0.0
        %1267 = vmatpush1.msra.mxu0 0.0
        %1268 = vmatprep.subr.mxu0 0.0
        %1269 = vmatpush1.msra.mxu0 0.0
        %1270 = vmatprep.subr.mxu0 0.0
        %1271 = vmatpush1.msra.mxu0 0.0
        %1272 = vmatprep.subr.mxu0 0.0
        %1273 = vmatpush1.msra.mxu0 0.0
        %1274 = vmatprep.subr.mxu0 0.0
        %1275 = vmatpush1.msra.mxu0 0.0
        %1276 = vmatprep.subr.mxu0 0.0
        %1277 = vmatpush1.msra.mxu0 0.0
        %1278 = vmatprep.subr.mxu0 0.0
        %1279 = vmatpush1.msra.mxu0 0.0
        %1280 = vmatprep.subr.mxu0 0.0
        %1281 = vmatpush1.msra.mxu0 0.0
        %1282 = vmatprep.subr.mxu0 0.0
        %1283 = vmatpush1.msra.mxu0 0.0
        %1284 = vmatprep.subr.mxu0 0.0
        %1285 = vmatpush1.msra.mxu0 0.0
        %1286 = vmatprep.subr.mxu0 0.0
        %1287 = vmatpush1.msra.mxu0 0.0
        %1288 = vmatprep.subr.mxu0 0.0
        %1289 = vmatpush1.msra.mxu0 0.0
        %1290 = vmatprep.subr.mxu0 0.0
        %1291 = vmatpush1.msra.mxu0 0.0
        %1292 = vmatprep.subr.mxu0 0.0
        %1293 = vmatpush1.msra.mxu0 0.0
        %1294 = vmatprep.subr.mxu0 0.0
        %1295 = vmatpush1.msra.mxu0 0.0
        %1296 = vmatprep.subr.mxu0 0.0
        %1297 = vmatpush1.msra.mxu0 0.0
        %1298 = vmatprep.subr.mxu0 0.0
        %1299 = vmatpush1.msra.mxu0 0.0
        %1300 = vmatprep.subr.mxu0 0.0
        %1301 = vmatpush1.msra.mxu0 0.0
        %1302 = vmatprep.subr.mxu0 0.0
        %1303 = vmatpush1.msra.mxu0 0.0
        %1304 = vmatprep.subr.mxu0 0.0
        %1305 = vmatpush1.msra.mxu0 0.0
        %1306 = vmatprep.subr.mxu0 0.0
        %1307 = vmatpush1.msra.mxu0 0.0
        %1308 = vmatprep.subr.mxu0 0.0
        %1309 = vmatpush1.msra.mxu0 0.0
        %1310 = vmatprep.subr.mxu0 0.0
        %1311 = vmatpush1.msra.mxu0 0.0
        %1312 = vmatprep.subr.mxu0 0.0
        %1313 = vmatpush1.msra.mxu0 0.0
        %1314 = vmatprep.subr.mxu0 0.0
        %1315 = vmatpush1.msra.mxu0 0.0
        %1316 = vmatprep.subr.mxu0 0.0
        %1317 = vmatpush1.msra.mxu0 0.0
        %1318 = vmatprep.mubr.f32.mxu0 0.0
        %1319 = vmatmul.mubr.f32.gmra.mrb[0].mxu0 %v1228
        %v1320 = vpop.f32.mrb[0].mxu0
        %v1321 = vadd.f32 0.0, %v1320
        %v1322 = vpop.f32.mrb[0].mxu0
        %1323 = vmatprep.mubr.f32.mxu0 0.0
        %1324 = vmatmul.mubr.f32.gmra.mrb[0].mxu0 %v1231
        %v1325 = vpop.f32.mrb[0].mxu0
        %v1326 = vadd.f32 0.0, %v1325
        %v1327 = vpop.f32.mrb[0].mxu0
        %1328 = vmatprep.mubr.f32.mxu0 0.0
        %1329 = vmatmul.mubr.f32.gmra.mrb[0].mxu0 %v1234
        %v1330 = vpop.f32.mrb[0].mxu0
        %v1331 = vadd.f32 0.0, %v1330
        %v1332 = vpop.f32.mrb[0].mxu0
        %1333 = vmatprep.mubr.f32.mxu0 0.0
        %1334 = vmatmul.mubr.f32.gmra.mrb[0].mxu0 %v1237
        %v1335 = vpop.f32.mrb[0].mxu0
        %v1336 = vadd.f32 0.0, %v1335
        %v1337 = vpop.f32.mrb[0].mxu0
        %1338 = vmatprep.mubr.f32.mxu0 0.0
        %1339 = vmatmul.mubr.f32.gmra.mrb[0].mxu0 %v1240
        %v1340 = vpop.f32.mrb[0].mxu0
        %v1341 = vadd.f32 0.0, %v1340
        %v1342 = vpop.f32.mrb[0].mxu0
        %1343 = vmatprep.mubr.f32.mxu0 0.0
        %1344 = vmatmul.mubr.f32.gmra.mrb[0].mxu0 %v1243
        %v1345 = vpop.f32.mrb[0].mxu0
        %v1346 = vadd.f32 0.0, %v1345
        %v1347 = vpop.f32.mrb[0].mxu0
        %1348 = vmatprep.mubr.f32.mxu0 0.0
        %1349 = vmatmul.mubr.f32.gmra.mrb[0].mxu0 %v1246
        %v1350 = vpop.f32.mrb[0].mxu0
        %v1351 = vadd.f32 0.0, %v1350
        %v1352 = vpop.f32.mrb[0].mxu0
        %1353 = vmatprep.mubr.f32.mxu0 0.0
        %1354 = vmatmul.mubr.f32.gmra.mrb[0].mxu0 %v1249
        %v1355 = vpop.f32.mrb[0].mxu0
        %v1356 = vadd.f32 0.0, %v1355
        %v1357 = vpop.f32.mrb[0].mxu0
        %1358 = vdwg.mxu0
        %v1359 = vld [vmem:[#allocation2] sm:$0xff]
        %v1360 = vld [vmem:[#allocation2 + $0x8] sm:$0xff]
        %v1361 = vld [vmem:[#allocation2 + $0x10] sm:$0xff]
        %v1362 = vld [vmem:[#allocation2 + $0x18] sm:$0xff]
        %v1363 = vld [vmem:[#allocation2 + $0x20] sm:$0xff]
        %v1364 = vld [vmem:[#allocation2 + $0x28] sm:$0xff]
        %v1365 = vld [vmem:[#allocation2 + $0x30] sm:$0xff]
        %v1366 = vld [vmem:[#allocation2 + $0x38] sm:$0xff]
        %v1367 = vadd.f32 %v1359, %v1321
        %v1368 = vadd.f32 %v1360, %v1326
        %v1369 = vadd.f32 %v1361, %v1331
        %v1370 = vadd.f32 %v1362, %v1336
        %v1371 = vadd.f32 %v1363, %v1341
        %v1372 = vadd.f32 %v1364, %v1346
        %v1373 = vadd.f32 %v1365, %v1351
        %v1374 = vadd.f32 %v1366, %v1356
        %1375 = vst.msk [vmem:[#allocation2] sm:$0xff] %vm742, %v1367
        %1376 = vst.msk [vmem:[#allocation2 + $0x8] sm:$0xff] %vm742, %v1368
        %1377 = vst.msk [vmem:[#allocation2 + $0x10] sm:$0xff] %vm742, %v1369
        %1378 = vst.msk [vmem:[#allocation2 + $0x18] sm:$0xff] %vm742, %v1370
        %1379 = vst.msk [vmem:[#allocation2 + $0x20] sm:$0xff] %vm742, %v1371
        %1380 = vst.msk [vmem:[#allocation2 + $0x28] sm:$0xff] %vm742, %v1372
        %1381 = vst.msk [vmem:[#allocation2 + $0x30] sm:$0xff] %vm742, %v1373
        %1382 = vst.msk [vmem:[#allocation2 + $0x38] sm:$0xff] %vm742, %v1374
        %s1383 = scalar_lea.vmem %s2, 16
        %v1384 = vld [vmem:[%s1383] sm:$0xf]
        %v1386 = vsel %vm742, %v729, 0
        %v1389 = vsel %vm742, %v730, 0
        %v1392 = vsel %vm742, %v731, 0
        %v1395 = vsel %vm742, %v732, 0
        %v1398 = vsel %vm742, %v733, 0
        %v1401 = vsel %vm742, %v734, 0
        %v1404 = vsel %vm742, %v735, 0
        %v1407 = vsel %vm742, %v736, 0
        %v1410 = vsel %vm767, %v1384, 0
        %1412 = vmatprep.subr.mxu0 0.0
        %1413 = vmatpush1.msra.mxu0 %v1410
        %1414 = vmatprep.subr.mxu0 0.0
        %1415 = vmatpush1.msra.mxu0 0.0
        %1416 = vmatprep.subr.mxu0 0.0
        %1417 = vmatpush1.msra.mxu0 0.0
        %1418 = vmatprep.subr.mxu0 0.0
        %1419 = vmatpush1.msra.mxu0 0.0
        %1420 = vmatprep.subr.mxu0 0.0
        %1421 = vmatpush1.msra.mxu0 0.0
        %1422 = vmatprep.subr.mxu0 0.0
        %1423 = vmatpush1.msra.mxu0 0.0
        %1424 = vmatprep.subr.mxu0 0.0
        %1425 = vmatpush1.msra.mxu0 0.0
        %1426 = vmatprep.subr.mxu0 0.0
        %1427 = vmatpush1.msra.mxu0 0.0
        %1428 = vmatprep.subr.mxu0 0.0
        %1429 = vmatpush1.msra.mxu0 0.0
        %1430 = vmatprep.subr.mxu0 0.0
        %1431 = vmatpush1.msra.mxu0 0.0
        %1432 = vmatprep.subr.mxu0 0.0
        %1433 = vmatpush1.msra.mxu0 0.0
        %1434 = vmatprep.subr.mxu0 0.0
        %1435 = vmatpush1.msra.mxu0 0.0
        %1436 = vmatprep.subr.mxu0 0.0
        %1437 = vmatpush1.msra.mxu0 0.0
        %1438 = vmatprep.subr.mxu0 0.0
        %1439 = vmatpush1.msra.mxu0 0.0
        %1440 = vmatprep.subr.mxu0 0.0
        %1441 = vmatpush1.msra.mxu0 0.0
        %1442 = vmatprep.subr.mxu0 0.0
        %1443 = vmatpush1.msra.mxu0 0.0
        %1444 = vmatprep.subr.mxu0 0.0
        %1445 = vmatpush1.msra.mxu0 0.0
        %1446 = vmatprep.subr.mxu0 0.0
        %1447 = vmatpush1.msra.mxu0 0.0
        %1448 = vmatprep.subr.mxu0 0.0
        %1449 = vmatpush1.msra.mxu0 0.0
        %1450 = vmatprep.subr.mxu0 0.0
        %1451 = vmatpush1.msra.mxu0 0.0
        %1452 = vmatprep.subr.mxu0 0.0
        %1453 = vmatpush1.msra.mxu0 0.0
        %1454 = vmatprep.subr.mxu0 0.0
        %1455 = vmatpush1.msra.mxu0 0.0
        %1456 = vmatprep.subr.mxu0 0.0
        %1457 = vmatpush1.msra.mxu0 0.0
        %1458 = vmatprep.subr.mxu0 0.0
        %1459 = vmatpush1.msra.mxu0 0.0
        %1460 = vmatprep.subr.mxu0 0.0
        %1461 = vmatpush1.msra.mxu0 0.0
        %1462 = vmatprep.subr.mxu0 0.0
        %1463 = vmatpush1.msra.mxu0 0.0
        %1464 = vmatprep.subr.mxu0 0.0
        %1465 = vmatpush1.msra.mxu0 0.0
        %1466 = vmatprep.subr.mxu0 0.0
        %1467 = vmatpush1.msra.mxu0 0.0
        %1468 = vmatprep.subr.mxu0 0.0
        %1469 = vmatpush1.msra.mxu0 0.0
        %1470 = vmatprep.subr.mxu0 0.0
        %1471 = vmatpush1.msra.mxu0 0.0
        %1472 = vmatprep.subr.mxu0 0.0
        %1473 = vmatpush1.msra.mxu0 0.0
        %1474 = vmatprep.subr.mxu0 0.0
        %1475 = vmatpush1.msra.mxu0 0.0
        %1476 = vmatprep.mubr.f32.mxu0 0.0
        %1477 = vmatmul.mubr.f32.gmra.mrb[0].mxu0 %v1386
        %v1478 = vpop.f32.mrb[0].mxu0
        %v1479 = vadd.f32 0.0, %v1478
        %v1480 = vpop.f32.mrb[0].mxu0
        %1481 = vmatprep.mubr.f32.mxu0 0.0
        %1482 = vmatmul.mubr.f32.gmra.mrb[0].mxu0 %v1389
        %v1483 = vpop.f32.mrb[0].mxu0
        %v1484 = vadd.f32 0.0, %v1483
        %v1485 = vpop.f32.mrb[0].mxu0
        %1486 = vmatprep.mubr.f32.mxu0 0.0
        %1487 = vmatmul.mubr.f32.gmra.mrb[0].mxu0 %v1392
        %v1488 = vpop.f32.mrb[0].mxu0
        %v1489 = vadd.f32 0.0, %v1488
        %v1490 = vpop.f32.mrb[0].mxu0
        %1491 = vmatprep.mubr.f32.mxu0 0.0
        %1492 = vmatmul.mubr.f32.gmra.mrb[0].mxu0 %v1395
        %v1493 = vpop.f32.mrb[0].mxu0
        %v1494 = vadd.f32 0.0, %v1493
        %v1495 = vpop.f32.mrb[0].mxu0
        %1496 = vmatprep.mubr.f32.mxu0 0.0
        %1497 = vmatmul.mubr.f32.gmra.mrb[0].mxu0 %v1398
        %v1498 = vpop.f32.mrb[0].mxu0
        %v1499 = vadd.f32 0.0, %v1498
        %v1500 = vpop.f32.mrb[0].mxu0
        %1501 = vmatprep.mubr.f32.mxu0 0.0
        %1502 = vmatmul.mubr.f32.gmra.mrb[0].mxu0 %v1401
        %v1503 = vpop.f32.mrb[0].mxu0
        %v1504 = vadd.f32 0.0, %v1503
        %v1505 = vpop.f32.mrb[0].mxu0
        %1506 = vmatprep.mubr.f32.mxu0 0.0
        %1507 = vmatmul.mubr.f32.gmra.mrb[0].mxu0 %v1404
        %v1508 = vpop.f32.mrb[0].mxu0
        %v1509 = vadd.f32 0.0, %v1508
        %v1510 = vpop.f32.mrb[0].mxu0
        %1511 = vmatprep.mubr.f32.mxu0 0.0
        %1512 = vmatmul.mubr.f32.gmra.mrb[0].mxu0 %v1407
        %v1513 = vpop.f32.mrb[0].mxu0
        %v1514 = vadd.f32 0.0, %v1513
        %v1515 = vpop.f32.mrb[0].mxu0
        %1516 = vdwg.mxu0
        %v1517 = vld [vmem:[#allocation2] sm:$0xff]
        %v1518 = vld [vmem:[#allocation2 + $0x8] sm:$0xff]
        %v1519 = vld [vmem:[#allocation2 + $0x10] sm:$0xff]
        %v1520 = vld [vmem:[#allocation2 + $0x18] sm:$0xff]
        %v1521 = vld [vmem:[#allocation2 + $0x20] sm:$0xff]
        %v1522 = vld [vmem:[#allocation2 + $0x28] sm:$0xff]
        %v1523 = vld [vmem:[#allocation2 + $0x30] sm:$0xff]
        %v1524 = vld [vmem:[#allocation2 + $0x38] sm:$0xff]
        %v1525 = vadd.f32 %v1517, %v1479
        %v1526 = vadd.f32 %v1518, %v1484
        %v1527 = vadd.f32 %v1519, %v1489
        %v1528 = vadd.f32 %v1520, %v1494
        %v1529 = vadd.f32 %v1521, %v1499
        %v1530 = vadd.f32 %v1522, %v1504
        %v1531 = vadd.f32 %v1523, %v1509
        %v1532 = vadd.f32 %v1524, %v1514
        %1533 = vst.msk [vmem:[#allocation2] sm:$0xff] %vm742, %v1525
        %1534 = vst.msk [vmem:[#allocation2 + $0x8] sm:$0xff] %vm742, %v1526
        %1535 = vst.msk [vmem:[#allocation2 + $0x10] sm:$0xff] %vm742, %v1527
        %1536 = vst.msk [vmem:[#allocation2 + $0x18] sm:$0xff] %vm742, %v1528
        %1537 = vst.msk [vmem:[#allocation2 + $0x20] sm:$0xff] %vm742, %v1529
        %1538 = vst.msk [vmem:[#allocation2 + $0x28] sm:$0xff] %vm742, %v1530
        %1539 = vst.msk [vmem:[#allocation2 + $0x30] sm:$0xff] %vm742, %v1531
        %1540 = vst.msk [vmem:[#allocation2 + $0x38] sm:$0xff] %vm742, %v1532
        %v1549 = vrot.slane %v712, 1
        %v1550 = vrot.slane %v713, 1
        %v1551 = vsel %vm1050, %v1549, %v1550
        %v1552 = vrot.slane %v714, 1
        %v1553 = vrot.slane %v715, 1
        %v1554 = vsel %vm1050, %v1552, %v1553
        %v1555 = vrot.slane %v716, 1
        %v1556 = vrot.slane %v717, 1
        %v1557 = vsel %vm1050, %v1555, %v1556
        %v1558 = vrot.slane %v718, 1
        %v1559 = vrot.slane %v719, 1
        %v1560 = vsel %vm1050, %v1558, %v1559
        %v1561 = vrot.slane %v720, 1
        %v1562 = vrot.slane %v721, 1
        %v1563 = vsel %vm1050, %v1561, %v1562
        %v1564 = vrot.slane %v722, 1
        %v1565 = vrot.slane %v723, 1
        %v1566 = vsel %vm1050, %v1564, %v1565
        %v1567 = vrot.slane %v724, 1
        %v1568 = vrot.slane %v725, 1
        %v1569 = vsel %vm1050, %v1567, %v1568
        %v1570 = vrot.slane %v726, 1
        %v1571 = vrot.slane %v727, 1
        %v1572 = vsel %vm1050, %v1570, %v1571
        %s1573 = scalar_lea.vmem %s2, 20
        %v1574 = vld [vmem:[%s1573] sm:$0xf]
        %v1575 = vsel %vm742, %v1551, 0
        %v1577 = vsel %vm742, %v1554, 0
        %v1579 = vsel %vm742, %v1557, 0
        %v1581 = vsel %vm742, %v1560, 0
        %v1583 = vsel %vm742, %v1563, 0
        %v1585 = vsel %vm742, %v1566, 0
        %v1587 = vsel %vm742, %v1569, 0
        %v1589 = vsel %vm742, %v1572, 0
        %v1592 = vsel %vm767, %v1574, 0
        %1594 = vmatprep.subr.mxu0 0.0
        %1595 = vmatpush1.msra.mxu0 %v1592
        %1596 = vmatprep.subr.mxu0 0.0
        %1597 = vmatpush1.msra.mxu0 0.0
        %1598 = vmatprep.subr.mxu0 0.0
        %1599 = vmatpush1.msra.mxu0 0.0
        %1600 = vmatprep.subr.mxu0 0.0
        %1601 = vmatpush1.msra.mxu0 0.0
        %1602 = vmatprep.subr.mxu0 0.0
        %1603 = vmatpush1.msra.mxu0 0.0
        %1604 = vmatprep.subr.mxu0 0.0
        %1605 = vmatpush1.msra.mxu0 0.0
        %1606 = vmatprep.subr.mxu0 0.0
        %1607 = vmatpush1.msra.mxu0 0.0
        %1608 = vmatprep.subr.mxu0 0.0
        %1609 = vmatpush1.msra.mxu0 0.0
        %1610 = vmatprep.subr.mxu0 0.0
        %1611 = vmatpush1.msra.mxu0 0.0
        %1612 = vmatprep.subr.mxu0 0.0
        %1613 = vmatpush1.msra.mxu0 0.0
        %1614 = vmatprep.subr.mxu0 0.0
        %1615 = vmatpush1.msra.mxu0 0.0
        %1616 = vmatprep.subr.mxu0 0.0
        %1617 = vmatpush1.msra.mxu0 0.0
        %1618 = vmatprep.subr.mxu0 0.0
        %1619 = vmatpush1.msra.mxu0 0.0
        %1620 = vmatprep.subr.mxu0 0.0
        %1621 = vmatpush1.msra.mxu0 0.0
        %1622 = vmatprep.subr.mxu0 0.0
        %1623 = vmatpush1.msra.mxu0 0.0
        %1624 = vmatprep.subr.mxu0 0.0
        %1625 = vmatpush1.msra.mxu0 0.0
        %1626 = vmatprep.subr.mxu0 0.0
        %1627 = vmatpush1.msra.mxu0 0.0
        %1628 = vmatprep.subr.mxu0 0.0
        %1629 = vmatpush1.msra.mxu0 0.0
        %1630 = vmatprep.subr.mxu0 0.0
        %1631 = vmatpush1.msra.mxu0 0.0
        %1632 = vmatprep.subr.mxu0 0.0
        %1633 = vmatpush1.msra.mxu0 0.0
        %1634 = vmatprep.subr.mxu0 0.0
        %1635 = vmatpush1.msra.mxu0 0.0
        %1636 = vmatprep.subr.mxu0 0.0
        %1637 = vmatpush1.msra.mxu0 0.0
        %1638 = vmatprep.subr.mxu0 0.0
        %1639 = vmatpush1.msra.mxu0 0.0
        %1640 = vmatprep.subr.mxu0 0.0
        %1641 = vmatpush1.msra.mxu0 0.0
        %1642 = vmatprep.subr.mxu0 0.0
        %1643 = vmatpush1.msra.mxu0 0.0
        %1644 = vmatprep.subr.mxu0 0.0
        %1645 = vmatpush1.msra.mxu0 0.0
        %1646 = vmatprep.subr.mxu0 0.0
        %1647 = vmatpush1.msra.mxu0 0.0
        %1648 = vmatprep.subr.mxu0 0.0
        %1649 = vmatpush1.msra.mxu0 0.0
        %1650 = vmatprep.subr.mxu0 0.0
        %1651 = vmatpush1.msra.mxu0 0.0
        %1652 = vmatprep.subr.mxu0 0.0
        %1653 = vmatpush1.msra.mxu0 0.0
        %1654 = vmatprep.subr.mxu0 0.0
        %1655 = vmatpush1.msra.mxu0 0.0
        %1656 = vmatprep.subr.mxu0 0.0
        %1657 = vmatpush1.msra.mxu0 0.0
        %1658 = vmatprep.mubr.f32.mxu0 0.0
        %1659 = vmatmul.mubr.f32.gmra.mrb[0].mxu0 %v1575
        %v1660 = vpop.f32.mrb[0].mxu0
        %v1661 = vadd.f32 0.0, %v1660
        %v1662 = vpop.f32.mrb[0].mxu0
        %1663 = vmatprep.mubr.f32.mxu0 0.0
        %1664 = vmatmul.mubr.f32.gmra.mrb[0].mxu0 %v1577
        %v1665 = vpop.f32.mrb[0].mxu0
        %v1666 = vadd.f32 0.0, %v1665
        %v1667 = vpop.f32.mrb[0].mxu0
        %1668 = vmatprep.mubr.f32.mxu0 0.0
        %1669 = vmatmul.mubr.f32.gmra.mrb[0].mxu0 %v1579
        %v1670 = vpop.f32.mrb[0].mxu0
        %v1671 = vadd.f32 0.0, %v1670
        %v1672 = vpop.f32.mrb[0].mxu0
        %1673 = vmatprep.mubr.f32.mxu0 0.0
        %1674 = vmatmul.mubr.f32.gmra.mrb[0].mxu0 %v1581
        %v1675 = vpop.f32.mrb[0].mxu0
        %v1676 = vadd.f32 0.0, %v1675
        %v1677 = vpop.f32.mrb[0].mxu0
        %1678 = vmatprep.mubr.f32.mxu0 0.0
        %1679 = vmatmul.mubr.f32.gmra.mrb[0].mxu0 %v1583
        %v1680 = vpop.f32.mrb[0].mxu0
        %v1681 = vadd.f32 0.0, %v1680
        %v1682 = vpop.f32.mrb[0].mxu0
        %1683 = vmatprep.mubr.f32.mxu0 0.0
        %1684 = vmatmul.mubr.f32.gmra.mrb[0].mxu0 %v1585
        %v1685 = vpop.f32.mrb[0].mxu0
        %v1686 = vadd.f32 0.0, %v1685
        %v1687 = vpop.f32.mrb[0].mxu0
        %1688 = vmatprep.mubr.f32.mxu0 0.0
        %1689 = vmatmul.mubr.f32.gmra.mrb[0].mxu0 %v1587
        %v1690 = vpop.f32.mrb[0].mxu0
        %v1691 = vadd.f32 0.0, %v1690
        %v1692 = vpop.f32.mrb[0].mxu0
        %1693 = vmatprep.mubr.f32.mxu0 0.0
        %1694 = vmatmul.mubr.f32.gmra.mrb[0].mxu0 %v1589
        %v1695 = vpop.f32.mrb[0].mxu0
        %v1696 = vadd.f32 0.0, %v1695
        %v1697 = vpop.f32.mrb[0].mxu0
        %1698 = vdwg.mxu0
        %v1699 = vld [vmem:[#allocation2] sm:$0xff]
        %v1700 = vld [vmem:[#allocation2 + $0x8] sm:$0xff]
        %v1701 = vld [vmem:[#allocation2 + $0x10] sm:$0xff]
        %v1702 = vld [vmem:[#allocation2 + $0x18] sm:$0xff]
        %v1703 = vld [vmem:[#allocation2 + $0x20] sm:$0xff]
        %v1704 = vld [vmem:[#allocation2 + $0x28] sm:$0xff]
        %v1705 = vld [vmem:[#allocation2 + $0x30] sm:$0xff]
        %v1706 = vld [vmem:[#allocation2 + $0x38] sm:$0xff]
        %v1707 = vadd.f32 %v1699, %v1661
        %v1708 = vadd.f32 %v1700, %v1666
        %v1709 = vadd.f32 %v1701, %v1671
        %v1710 = vadd.f32 %v1702, %v1676
        %v1711 = vadd.f32 %v1703, %v1681
        %v1712 = vadd.f32 %v1704, %v1686
        %v1713 = vadd.f32 %v1705, %v1691
        %v1714 = vadd.f32 %v1706, %v1696
        %1715 = vst.msk [vmem:[#allocation2] sm:$0xff] %vm742, %v1707
        %1716 = vst.msk [vmem:[#allocation2 + $0x8] sm:$0xff] %vm742, %v1708
        %1717 = vst.msk [vmem:[#allocation2 + $0x10] sm:$0xff] %vm742, %v1709
        %1718 = vst.msk [vmem:[#allocation2 + $0x18] sm:$0xff] %vm742, %v1710
        %1719 = vst.msk [vmem:[#allocation2 + $0x20] sm:$0xff] %vm742, %v1711
        %1720 = vst.msk [vmem:[#allocation2 + $0x28] sm:$0xff] %vm742, %v1712
        %1721 = vst.msk [vmem:[#allocation2 + $0x30] sm:$0xff] %vm742, %v1713
        %1722 = vst.msk [vmem:[#allocation2 + $0x38] sm:$0xff] %vm742, %v1714
        %s1723 = scalar_lea.vmem %s2, 24
        %v1724 = vld [vmem:[%s1723] sm:$0xf]
        %v1726 = vsel %vm742, %v737, 0
        %v1729 = vsel %vm767, %v1724, 0
        %1731 = vmatprep.subr.mxu0 0.0
        %1732 = vmatpush1.msra.mxu0 %v1729
        %1733 = vmatprep.subr.mxu0 0.0
        %1734 = vmatpush1.msra.mxu0 0.0
        %1735 = vmatprep.subr.mxu0 0.0
        %1736 = vmatpush1.msra.mxu0 0.0
        %1737 = vmatprep.subr.mxu0 0.0
        %1738 = vmatpush1.msra.mxu0 0.0
        %1739 = vmatprep.subr.mxu0 0.0
        %1740 = vmatpush1.msra.mxu0 0.0
        %1741 = vmatprep.subr.mxu0 0.0
        %1742 = vmatpush1.msra.mxu0 0.0
        %1743 = vmatprep.subr.mxu0 0.0
        %1744 = vmatpush1.msra.mxu0 0.0
        %1745 = vmatprep.subr.mxu0 0.0
        %1746 = vmatpush1.msra.mxu0 0.0
        %1747 = vmatprep.subr.mxu0 0.0
        %1748 = vmatpush1.msra.mxu0 0.0
        %1749 = vmatprep.subr.mxu0 0.0
        %1750 = vmatpush1.msra.mxu0 0.0
        %1751 = vmatprep.subr.mxu0 0.0
        %1752 = vmatpush1.msra.mxu0 0.0
        %1753 = vmatprep.subr.mxu0 0.0
        %1754 = vmatpush1.msra.mxu0 0.0
        %1755 = vmatprep.subr.mxu0 0.0
        %1756 = vmatpush1.msra.mxu0 0.0
        %1757 = vmatprep.subr.mxu0 0.0
        %1758 = vmatpush1.msra.mxu0 0.0
        %1759 = vmatprep.subr.mxu0 0.0
        %1760 = vmatpush1.msra.mxu0 0.0
        %1761 = vmatprep.subr.mxu0 0.0
        %1762 = vmatpush1.msra.mxu0 0.0
        %1763 = vmatprep.subr.mxu0 0.0
        %1764 = vmatpush1.msra.mxu0 0.0
        %1765 = vmatprep.subr.mxu0 0.0
        %1766 = vmatpush1.msra.mxu0 0.0
        %1767 = vmatprep.subr.mxu0 0.0
        %1768 = vmatpush1.msra.mxu0 0.0
        %1769 = vmatprep.subr.mxu0 0.0
        %1770 = vmatpush1.msra.mxu0 0.0
        %1771 = vmatprep.subr.mxu0 0.0
        %1772 = vmatpush1.msra.mxu0 0.0
        %1773 = vmatprep.subr.mxu0 0.0
        %1774 = vmatpush1.msra.mxu0 0.0
        %1775 = vmatprep.subr.mxu0 0.0
        %1776 = vmatpush1.msra.mxu0 0.0
        %1777 = vmatprep.subr.mxu0 0.0
        %1778 = vmatpush1.msra.mxu0 0.0
        %1779 = vmatprep.subr.mxu0 0.0
        %1780 = vmatpush1.msra.mxu0 0.0
        %1781 = vmatprep.subr.mxu0 0.0
        %1782 = vmatpush1.msra.mxu0 0.0
        %1783 = vmatprep.subr.mxu0 0.0
        %1784 = vmatpush1.msra.mxu0 0.0
        %1785 = vmatprep.subr.mxu0 0.0
        %1786 = vmatpush1.msra.mxu0 0.0
        %1787 = vmatprep.subr.mxu0 0.0
        %1788 = vmatpush1.msra.mxu0 0.0
        %1789 = vmatprep.subr.mxu0 0.0
        %1790 = vmatpush1.msra.mxu0 0.0
        %1791 = vmatprep.subr.mxu0 0.0
        %1792 = vmatpush1.msra.mxu0 0.0
        %1793 = vmatprep.subr.mxu0 0.0
        %1794 = vmatpush1.msra.mxu0 0.0
        %1795 = vmatprep.mubr.f32.mxu0 0.0
        %1796 = vmatmul.mubr.f32.gmra.mrb[0].mxu0 %v747
        %v1797 = vpop.f32.mrb[0].mxu0
        %v1798 = vadd.f32 0.0, %v1797
        %v1799 = vpop.f32.mrb[0].mxu0
        %1800 = vmatprep.mubr.f32.mxu0 0.0
        %1801 = vmatmul.mubr.f32.gmra.mrb[0].mxu0 %v750
        %v1802 = vpop.f32.mrb[0].mxu0
        %v1803 = vadd.f32 0.0, %v1802
        %v1804 = vpop.f32.mrb[0].mxu0
        %1805 = vmatprep.mubr.f32.mxu0 0.0
        %1806 = vmatmul.mubr.f32.gmra.mrb[0].mxu0 %v753
        %v1807 = vpop.f32.mrb[0].mxu0
        %v1808 = vadd.f32 0.0, %v1807
        %v1809 = vpop.f32.mrb[0].mxu0
        %1810 = vmatprep.mubr.f32.mxu0 0.0
        %1811 = vmatmul.mubr.f32.gmra.mrb[0].mxu0 %v756
        %v1812 = vpop.f32.mrb[0].mxu0
        %v1813 = vadd.f32 0.0, %v1812
        %v1814 = vpop.f32.mrb[0].mxu0
        %1815 = vmatprep.mubr.f32.mxu0 0.0
        %1816 = vmatmul.mubr.f32.gmra.mrb[0].mxu0 %v759
        %v1817 = vpop.f32.mrb[0].mxu0
        %v1818 = vadd.f32 0.0, %v1817
        %v1819 = vpop.f32.mrb[0].mxu0
        %1820 = vmatprep.mubr.f32.mxu0 0.0
        %1821 = vmatmul.mubr.f32.gmra.mrb[0].mxu0 %v762
        %v1822 = vpop.f32.mrb[0].mxu0
        %v1823 = vadd.f32 0.0, %v1822
        %v1824 = vpop.f32.mrb[0].mxu0
        %1825 = vmatprep.mubr.f32.mxu0 0.0
        %1826 = vmatmul.mubr.f32.gmra.mrb[0].mxu0 %v765
        %v1827 = vpop.f32.mrb[0].mxu0
        %v1828 = vadd.f32 0.0, %v1827
        %v1829 = vpop.f32.mrb[0].mxu0
        %1830 = vmatprep.mubr.f32.mxu0 0.0
        %1831 = vmatmul.mubr.f32.gmra.mrb[0].mxu0 %v1726
        %v1832 = vpop.f32.mrb[0].mxu0
        %v1833 = vadd.f32 0.0, %v1832
        %v1834 = vpop.f32.mrb[0].mxu0
        %1835 = vdwg.mxu0
        %v1836 = vld [vmem:[#allocation2] sm:$0xff]
        %v1837 = vld [vmem:[#allocation2 + $0x8] sm:$0xff]
        %v1838 = vld [vmem:[#allocation2 + $0x10] sm:$0xff]
        %v1839 = vld [vmem:[#allocation2 + $0x18] sm:$0xff]
        %v1840 = vld [vmem:[#allocation2 + $0x20] sm:$0xff]
        %v1841 = vld [vmem:[#allocation2 + $0x28] sm:$0xff]
        %v1842 = vld [vmem:[#allocation2 + $0x30] sm:$0xff]
        %v1843 = vld [vmem:[#allocation2 + $0x38] sm:$0xff]
        %v1844 = vadd.f32 %v1836, %v1798
        %v1845 = vadd.f32 %v1837, %v1803
        %v1846 = vadd.f32 %v1838, %v1808
        %v1847 = vadd.f32 %v1839, %v1813
        %v1848 = vadd.f32 %v1840, %v1818
        %v1849 = vadd.f32 %v1841, %v1823
        %v1850 = vadd.f32 %v1842, %v1828
        %v1851 = vadd.f32 %v1843, %v1833
        %1852 = vst.msk [vmem:[#allocation2] sm:$0xff] %vm742, %v1844
        %1853 = vst.msk [vmem:[#allocation2 + $0x8] sm:$0xff] %vm742, %v1845
        %1854 = vst.msk [vmem:[#allocation2 + $0x10] sm:$0xff] %vm742, %v1846
        %1855 = vst.msk [vmem:[#allocation2 + $0x18] sm:$0xff] %vm742, %v1847
        %1856 = vst.msk [vmem:[#allocation2 + $0x20] sm:$0xff] %vm742, %v1848
        %1857 = vst.msk [vmem:[#allocation2 + $0x28] sm:$0xff] %vm742, %v1849
        %1858 = vst.msk [vmem:[#allocation2 + $0x30] sm:$0xff] %vm742, %v1850
        %1859 = vst.msk [vmem:[#allocation2 + $0x38] sm:$0xff] %vm742, %v1851
        %s1860 = scalar_lea.vmem %s2, 28
        %v1861 = vld [vmem:[%s1860] sm:$0xf]
        %v1863 = vsel %vm742, %v740, 0
        %v1866 = vsel %vm767, %v1861, 0
        %1868 = vmatprep.subr.mxu0 0.0
        %1869 = vmatpush1.msra.mxu0 %v1866
        %1870 = vmatprep.subr.mxu0 0.0
        %1871 = vmatpush1.msra.mxu0 0.0
        %1872 = vmatprep.subr.mxu0 0.0
        %1873 = vmatpush1.msra.mxu0 0.0
        %1874 = vmatprep.subr.mxu0 0.0
        %1875 = vmatpush1.msra.mxu0 0.0
        %1876 = vmatprep.subr.mxu0 0.0
        %1877 = vmatpush1.msra.mxu0 0.0
        %1878 = vmatprep.subr.mxu0 0.0
        %1879 = vmatpush1.msra.mxu0 0.0
        %1880 = vmatprep.subr.mxu0 0.0
        %1881 = vmatpush1.msra.mxu0 0.0
        %1882 = vmatprep.subr.mxu0 0.0
        %1883 = vmatpush1.msra.mxu0 0.0
        %1884 = vmatprep.subr.mxu0 0.0
        %1885 = vmatpush1.msra.mxu0 0.0
        %1886 = vmatprep.subr.mxu0 0.0
        %1887 = vmatpush1.msra.mxu0 0.0
        %1888 = vmatprep.subr.mxu0 0.0
        %1889 = vmatpush1.msra.mxu0 0.0
        %1890 = vmatprep.subr.mxu0 0.0
        %1891 = vmatpush1.msra.mxu0 0.0
        %1892 = vmatprep.subr.mxu0 0.0
        %1893 = vmatpush1.msra.mxu0 0.0
        %1894 = vmatprep.subr.mxu0 0.0
        %1895 = vmatpush1.msra.mxu0 0.0
        %1896 = vmatprep.subr.mxu0 0.0
        %1897 = vmatpush1.msra.mxu0 0.0
        %1898 = vmatprep.subr.mxu0 0.0
        %1899 = vmatpush1.msra.mxu0 0.0
        %1900 = vmatprep.subr.mxu0 0.0
        %1901 = vmatpush1.msra.mxu0 0.0
        %1902 = vmatprep.subr.mxu0 0.0
        %1903 = vmatpush1.msra.mxu0 0.0
        %1904 = vmatprep.subr.mxu0 0.0
        %1905 = vmatpush1.msra.mxu0 0.0
        %1906 = vmatprep.subr.mxu0 0.0
        %1907 = vmatpush1.msra.mxu0 0.0
        %1908 = vmatprep.subr.mxu0 0.0
        %1909 = vmatpush1.msra.mxu0 0.0
        %1910 = vmatprep.subr.mxu0 0.0
        %1911 = vmatpush1.msra.mxu0 0.0
        %1912 = vmatprep.subr.mxu0 0.0
        %1913 = vmatpush1.msra.mxu0 0.0
        %1914 = vmatprep.subr.mxu0 0.0
        %1915 = vmatpush1.msra.mxu0 0.0
        %1916 = vmatprep.subr.mxu0 0.0
        %1917 = vmatpush1.msra.mxu0 0.0
        %1918 = vmatprep.subr.mxu0 0.0
        %1919 = vmatpush1.msra.mxu0 0.0
        %1920 = vmatprep.subr.mxu0 0.0
        %1921 = vmatpush1.msra.mxu0 0.0
        %1922 = vmatprep.subr.mxu0 0.0
        %1923 = vmatpush1.msra.mxu0 0.0
        %1924 = vmatprep.subr.mxu0 0.0
        %1925 = vmatpush1.msra.mxu0 0.0
        %1926 = vmatprep.subr.mxu0 0.0
        %1927 = vmatpush1.msra.mxu0 0.0
        %1928 = vmatprep.subr.mxu0 0.0
        %1929 = vmatpush1.msra.mxu0 0.0
        %1930 = vmatprep.subr.mxu0 0.0
        %1931 = vmatpush1.msra.mxu0 0.0
        %1932 = vmatprep.mubr.f32.mxu0 0.0
        %1933 = vmatmul.mubr.f32.gmra.mrb[0].mxu0 %v890
        %v1934 = vpop.f32.mrb[0].mxu0
        %v1935 = vadd.f32 0.0, %v1934
        %v1936 = vpop.f32.mrb[0].mxu0
        %1937 = vmatprep.mubr.f32.mxu0 0.0
        %1938 = vmatmul.mubr.f32.gmra.mrb[0].mxu0 %v893
        %v1939 = vpop.f32.mrb[0].mxu0
        %v1940 = vadd.f32 0.0, %v1939
        %v1941 = vpop.f32.mrb[0].mxu0
        %1942 = vmatprep.mubr.f32.mxu0 0.0
        %1943 = vmatmul.mubr.f32.gmra.mrb[0].mxu0 %v896
        %v1944 = vpop.f32.mrb[0].mxu0
        %v1945 = vadd.f32 0.0, %v1944
        %v1946 = vpop.f32.mrb[0].mxu0
        %1947 = vmatprep.mubr.f32.mxu0 0.0
        %1948 = vmatmul.mubr.f32.gmra.mrb[0].mxu0 %v899
        %v1949 = vpop.f32.mrb[0].mxu0
        %v1950 = vadd.f32 0.0, %v1949
        %v1951 = vpop.f32.mrb[0].mxu0
        %1952 = vmatprep.mubr.f32.mxu0 0.0
        %1953 = vmatmul.mubr.f32.gmra.mrb[0].mxu0 %v902
        %v1954 = vpop.f32.mrb[0].mxu0
        %v1955 = vadd.f32 0.0, %v1954
        %v1956 = vpop.f32.mrb[0].mxu0
        %1957 = vmatprep.mubr.f32.mxu0 0.0
        %1958 = vmatmul.mubr.f32.gmra.mrb[0].mxu0 %v905
        %v1959 = vpop.f32.mrb[0].mxu0
        %v1960 = vadd.f32 0.0, %v1959
        %v1961 = vpop.f32.mrb[0].mxu0
        %1962 = vmatprep.mubr.f32.mxu0 0.0
        %1963 = vmatmul.mubr.f32.gmra.mrb[0].mxu0 %v908
        %v1964 = vpop.f32.mrb[0].mxu0
        %v1965 = vadd.f32 0.0, %v1964
        %v1966 = vpop.f32.mrb[0].mxu0
        %1967 = vmatprep.mubr.f32.mxu0 0.0
        %1968 = vmatmul.mubr.f32.gmra.mrb[0].mxu0 %v1863
        %v1969 = vpop.f32.mrb[0].mxu0
        %v1970 = vadd.f32 0.0, %v1969
        %v1971 = vpop.f32.mrb[0].mxu0
        %1972 = vdwg.mxu0
        %v1973 = vld [vmem:[#allocation2] sm:$0xff]
        %v1974 = vld [vmem:[#allocation2 + $0x8] sm:$0xff]
        %v1975 = vld [vmem:[#allocation2 + $0x10] sm:$0xff]
        %v1976 = vld [vmem:[#allocation2 + $0x18] sm:$0xff]
        %v1977 = vld [vmem:[#allocation2 + $0x20] sm:$0xff]
        %v1978 = vld [vmem:[#allocation2 + $0x28] sm:$0xff]
        %v1979 = vld [vmem:[#allocation2 + $0x30] sm:$0xff]
        %v1980 = vld [vmem:[#allocation2 + $0x38] sm:$0xff]
        %v1981 = vadd.f32 %v1973, %v1935
        %v1982 = vadd.f32 %v1974, %v1940
        %v1983 = vadd.f32 %v1975, %v1945
        %v1984 = vadd.f32 %v1976, %v1950
        %v1985 = vadd.f32 %v1977, %v1955
        %v1986 = vadd.f32 %v1978, %v1960
        %v1987 = vadd.f32 %v1979, %v1965
        %v1988 = vadd.f32 %v1980, %v1970
        %1989 = vst.msk [vmem:[#allocation2] sm:$0xff] %vm742, %v1981
        %1990 = vst.msk [vmem:[#allocation2 + $0x8] sm:$0xff] %vm742, %v1982
        %1991 = vst.msk [vmem:[#allocation2 + $0x10] sm:$0xff] %vm742, %v1983
        %1992 = vst.msk [vmem:[#allocation2 + $0x18] sm:$0xff] %vm742, %v1984
        %1993 = vst.msk [vmem:[#allocation2 + $0x20] sm:$0xff] %vm742, %v1985
        %1994 = vst.msk [vmem:[#allocation2 + $0x28] sm:$0xff] %vm742, %v1986
        %1995 = vst.msk [vmem:[#allocation2 + $0x30] sm:$0xff] %vm742, %v1987
        %1996 = vst.msk [vmem:[#allocation2 + $0x38] sm:$0xff] %vm742, %v1988
        %v1998 = vrot.slane %v737, 1
        %v1999 = vrot.slane %v738, 1
        %v2000 = vsel %vm1050, %v1998, %v1999
        %s2001 = scalar_lea.vmem %s2, 32
        %v2002 = vld [vmem:[%s2001] sm:$0xf]
        %v2003 = vsel %vm742, %v2000, 0
        %v2006 = vsel %vm767, %v2002, 0
        %2008 = vmatprep.subr.mxu0 0.0
        %2009 = vmatpush1.msra.mxu0 %v2006
        %2010 = vmatprep.subr.mxu0 0.0
        %2011 = vmatpush1.msra.mxu0 0.0
        %2012 = vmatprep.subr.mxu0 0.0
        %2013 = vmatpush1.msra.mxu0 0.0
        %2014 = vmatprep.subr.mxu0 0.0
        %2015 = vmatpush1.msra.mxu0 0.0
        %2016 = vmatprep.subr.mxu0 0.0
        %2017 = vmatpush1.msra.mxu0 0.0
        %2018 = vmatprep.subr.mxu0 0.0
        %2019 = vmatpush1.msra.mxu0 0.0
        %2020 = vmatprep.subr.mxu0 0.0
        %2021 = vmatpush1.msra.mxu0 0.0
        %2022 = vmatprep.subr.mxu0 0.0
        %2023 = vmatpush1.msra.mxu0 0.0
        %2024 = vmatprep.subr.mxu0 0.0
        %2025 = vmatpush1.msra.mxu0 0.0
        %2026 = vmatprep.subr.mxu0 0.0
        %2027 = vmatpush1.msra.mxu0 0.0
        %2028 = vmatprep.subr.mxu0 0.0
        %2029 = vmatpush1.msra.mxu0 0.0
        %2030 = vmatprep.subr.mxu0 0.0
        %2031 = vmatpush1.msra.mxu0 0.0
        %2032 = vmatprep.subr.mxu0 0.0
        %2033 = vmatpush1.msra.mxu0 0.0
        %2034 = vmatprep.subr.mxu0 0.0
        %2035 = vmatpush1.msra.mxu0 0.0
        %2036 = vmatprep.subr.mxu0 0.0
        %2037 = vmatpush1.msra.mxu0 0.0
        %2038 = vmatprep.subr.mxu0 0.0
        %2039 = vmatpush1.msra.mxu0 0.0
        %2040 = vmatprep.subr.mxu0 0.0
        %2041 = vmatpush1.msra.mxu0 0.0
        %2042 = vmatprep.subr.mxu0 0.0
        %2043 = vmatpush1.msra.mxu0 0.0
        %2044 = vmatprep.subr.mxu0 0.0
        %2045 = vmatpush1.msra.mxu0 0.0
        %2046 = vmatprep.subr.mxu0 0.0
        %2047 = vmatpush1.msra.mxu0 0.0
        %2048 = vmatprep.subr.mxu0 0.0
        %2049 = vmatpush1.msra.mxu0 0.0
        %2050 = vmatprep.subr.mxu0 0.0
        %2051 = vmatpush1.msra.mxu0 0.0
        %2052 = vmatprep.subr.mxu0 0.0
        %2053 = vmatpush1.msra.mxu0 0.0
        %2054 = vmatprep.subr.mxu0 0.0
        %2055 = vmatpush1.msra.mxu0 0.0
        %2056 = vmatprep.subr.mxu0 0.0
        %2057 = vmatpush1.msra.mxu0 0.0
        %2058 = vmatprep.subr.mxu0 0.0
        %2059 = vmatpush1.msra.mxu0 0.0
        %2060 = vmatprep.subr.mxu0 0.0
        %2061 = vmatpush1.msra.mxu0 0.0
        %2062 = vmatprep.subr.mxu0 0.0
        %2063 = vmatpush1.msra.mxu0 0.0
        %2064 = vmatprep.subr.mxu0 0.0
        %2065 = vmatpush1.msra.mxu0 0.0
        %2066 = vmatprep.subr.mxu0 0.0
        %2067 = vmatpush1.msra.mxu0 0.0
        %2068 = vmatprep.subr.mxu0 0.0
        %2069 = vmatpush1.msra.mxu0 0.0
        %2070 = vmatprep.subr.mxu0 0.0
        %2071 = vmatpush1.msra.mxu0 0.0
        %2072 = vmatprep.mubr.f32.mxu0 0.0
        %2073 = vmatmul.mubr.f32.gmra.mrb[0].mxu0 %v1079
        %v2074 = vpop.f32.mrb[0].mxu0
        %v2075 = vadd.f32 0.0, %v2074
        %v2076 = vpop.f32.mrb[0].mxu0
        %2077 = vmatprep.mubr.f32.mxu0 0.0
        %2078 = vmatmul.mubr.f32.gmra.mrb[0].mxu0 %v1081
        %v2079 = vpop.f32.mrb[0].mxu0
        %v2080 = vadd.f32 0.0, %v2079
        %v2081 = vpop.f32.mrb[0].mxu0
        %2082 = vmatprep.mubr.f32.mxu0 0.0
        %2083 = vmatmul.mubr.f32.gmra.mrb[0].mxu0 %v1083
        %v2084 = vpop.f32.mrb[0].mxu0
        %v2085 = vadd.f32 0.0, %v2084
        %v2086 = vpop.f32.mrb[0].mxu0
        %2087 = vmatprep.mubr.f32.mxu0 0.0
        %2088 = vmatmul.mubr.f32.gmra.mrb[0].mxu0 %v1085
        %v2089 = vpop.f32.mrb[0].mxu0
        %v2090 = vadd.f32 0.0, %v2089
        %v2091 = vpop.f32.mrb[0].mxu0
        %2092 = vmatprep.mubr.f32.mxu0 0.0
        %2093 = vmatmul.mubr.f32.gmra.mrb[0].mxu0 %v1087
        %v2094 = vpop.f32.mrb[0].mxu0
        %v2095 = vadd.f32 0.0, %v2094
        %v2096 = vpop.f32.mrb[0].mxu0
        %2097 = vmatprep.mubr.f32.mxu0 0.0
        %2098 = vmatmul.mubr.f32.gmra.mrb[0].mxu0 %v1089
        %v2099 = vpop.f32.mrb[0].mxu0
        %v2100 = vadd.f32 0.0, %v2099
        %v2101 = vpop.f32.mrb[0].mxu0
        %2102 = vmatprep.mubr.f32.mxu0 0.0
        %2103 = vmatmul.mubr.f32.gmra.mrb[0].mxu0 %v1091
        %v2104 = vpop.f32.mrb[0].mxu0
        %v2105 = vadd.f32 0.0, %v2104
        %v2106 = vpop.f32.mrb[0].mxu0
        %2107 = vmatprep.mubr.f32.mxu0 0.0
        %2108 = vmatmul.mubr.f32.gmra.mrb[0].mxu0 %v2003
        %v2109 = vpop.f32.mrb[0].mxu0
        %v2110 = vadd.f32 0.0, %v2109
        %v2111 = vpop.f32.mrb[0].mxu0
        %2112 = vdwg.mxu0
        %v2113 = vld [vmem:[#allocation2] sm:$0xff]
        %v2114 = vld [vmem:[#allocation2 + $0x8] sm:$0xff]
        %v2115 = vld [vmem:[#allocation2 + $0x10] sm:$0xff]
        %v2116 = vld [vmem:[#allocation2 + $0x18] sm:$0xff]
        %v2117 = vld [vmem:[#allocation2 + $0x20] sm:$0xff]
        %v2118 = vld [vmem:[#allocation2 + $0x28] sm:$0xff]
        %v2119 = vld [vmem:[#allocation2 + $0x30] sm:$0xff]
        %v2120 = vld [vmem:[#allocation2 + $0x38] sm:$0xff]
        %v2121 = vadd.f32 %v2113, %v2075
        %v2122 = vadd.f32 %v2114, %v2080
        %v2123 = vadd.f32 %v2115, %v2085
        %v2124 = vadd.f32 %v2116, %v2090
        %v2125 = vadd.f32 %v2117, %v2095
        %v2126 = vadd.f32 %v2118, %v2100
        %v2127 = vadd.f32 %v2119, %v2105
        %v2128 = vadd.f32 %v2120, %v2110
        %2129 = vst.msk [vmem:[#allocation2] sm:$0xff] %vm742, %v2121
        %2130 = vst.msk [vmem:[#allocation2 + $0x8] sm:$0xff] %vm742, %v2122
        %2131 = vst.msk [vmem:[#allocation2 + $0x10] sm:$0xff] %vm742, %v2123
        %2132 = vst.msk [vmem:[#allocation2 + $0x18] sm:$0xff] %vm742, %v2124
        %2133 = vst.msk [vmem:[#allocation2 + $0x20] sm:$0xff] %vm742, %v2125
        %2134 = vst.msk [vmem:[#allocation2 + $0x28] sm:$0xff] %vm742, %v2126
        %2135 = vst.msk [vmem:[#allocation2 + $0x30] sm:$0xff] %vm742, %v2127
        %2136 = vst.msk [vmem:[#allocation2 + $0x38] sm:$0xff] %vm742, %v2128
        %v2137 = vld [vmem:[#allocation2] sm:$0xff]
        %v2138 = vld [vmem:[#allocation2 + $0x8] sm:$0xff]
        %v2139 = vld [vmem:[#allocation2 + $0x10] sm:$0xff]
        %v2140 = vld [vmem:[#allocation2 + $0x18] sm:$0xff]
        %v2141 = vld [vmem:[#allocation2 + $0x20] sm:$0xff]
        %v2142 = vld [vmem:[#allocation2 + $0x28] sm:$0xff]
        %v2143 = vld [vmem:[#allocation2 + $0x30] sm:$0xff]
        %v2144 = vld [vmem:[#allocation2 + $0x38] sm:$0xff]
        %v2145 = vld [vmem:[%s3] sm:$0x1]
        %v2147 = vlaneseq
        %v2148 = vshrl.u32 %v2147, 7
        %v2149 = vsub.s32 0, %v2148
        %v2150 = vrot.slane %v2145, %v2149
        %v2152 = vadd.f32 %v2137, %v2150
        %v2153 = vadd.f32 %v2138, %v2150
        %v2154 = vadd.f32 %v2139, %v2150
        %v2155 = vadd.f32 %v2140, %v2150
        %v2156 = vadd.f32 %v2141, %v2150
        %v2157 = vadd.f32 %v2142, %v2150
        %v2158 = vadd.f32 %v2143, %v2150
        %v2159 = vadd.f32 %v2144, %v2150
        %2160 = vst.msk [vmem:[%s684] sm:$0xff] %vm742, %v2152
        %2161 = vst.msk [vmem:[%s684 + $0x8] sm:$0xff] %vm742, %v2153
        %2162 = vst.msk [vmem:[%s684 + $0x10] sm:$0xff] %vm742, %v2154
        %2163 = vst.msk [vmem:[%s684 + $0x18] sm:$0xff] %vm742, %v2155
        %2164 = vst.msk [vmem:[%s684 + $0x20] sm:$0xff] %vm742, %v2156
        %2165 = vst.msk [vmem:[%s684 + $0x28] sm:$0xff] %vm742, %v2157
        %2166 = vst.msk [vmem:[%s684 + $0x30] sm:$0xff] %vm742, %v2158
        %2167 = vst.msk [vmem:[%s684 + $0x38] sm:$0xff] %vm742, %v2159
        %s2168 = smul.u32 8, %s20
        %p2169 = scmp.lt.s32.totalorder %s19, 1
        %s2170 = scalar_select %p2169, %s19, 1
        %p2171 = scmp.lt.s32.totalorder %s2168, 7
        %s2172 = scalar_select %p2171, %s2168, 7
        %s2173 = smul.addr %s2170, 8
        %s2174 = sadd.s32 %s2172, %s2173
        %s2175 = smul.addr %s2174, 8
        %s2176 = scalar_lea.vmem %s4, %s2175
        // Predicated region
        $region127: #{tpu_custom_call.1} parent=117 // pred_check
          %p2177 = pneg %p149
        $region128: #{tpu_custom_call.1} parent=117 // pred_check_branch
          %2179 = sbr.rel (%p2177) target = $region130
        $region129: #{tpu_custom_call.1} parent=117 // pred_region
          %s2180 = smul.u32 8, %s20
        $region130: #{tpu_custom_call.1} parent=117 // pred_fallthru
          _
      $region118: #{tpu_custom_call.1} parent=5 // pred_fallthru
        _
      %p2181 = scmp.le.s32.totalorder 2, %s10
      // Predicated region
      $region131: #{tpu_custom_call.1} parent=5 // pred_check
        %p2182 = pneg %p2181
      $region132: #{tpu_custom_call.1} parent=5 // pred_check_branch
        %2184 = sbr.rel (%p2182) target = $region134
      $region133: #{tpu_custom_call.1} parent=5 // pred_region
        %s2185 = ssub.s32 %s10, 2
        // Predicated region
        $region135: #{tpu_custom_call.1} parent=133 // pred_check
          %p2186 = pneg %p155
        $region136: #{tpu_custom_call.1} parent=133 // pred_check_branch
          %2188 = sbr.rel (%p2186) target = $region138
        $region137: #{tpu_custom_call.1} parent=133 // pred_region
          %s2189 = smul.u32 8, %s22
          %p2190 = scmp.lt.s32.totalorder %s21, 1
          %s2191 = scalar_select %p2190, %s21, 1
          %p2192 = scmp.lt.s32.totalorder %s2189, 7
          %s2193 = scalar_select %p2192, %s2189, 7
          %s2194 = smul.addr %s2191, 8
          %s2195 = sadd.s32 %s2193, %s2194
          %s2196 = smul.addr %s2195, 8
          %s2197 = scalar_lea.vmem %s4, %s2196
        $region138: #{tpu_custom_call.1} parent=133 // pred_fallthru
          _
      $region134: #{tpu_custom_call.1} parent=5 // pred_fallthru
        _
    $region6: #{tpu_custom_call.1} parent=1 // loop_footer
      %s14 = sadd.s32 1, %s10
    $region7: #{tpu_custom_call.1} parent=1 // loop_footer_branch
      %9 = sbr.rel target = $region3
    $region8: #{tpu_custom_call.1} parent=1 // loop_exit
      _

</llo_original>
